<compile_context>
chip_gen: v7x
topology: tpu7x:2x2x1
jax: 0.10.0
libtpu: 0.0.40
codegen_flags: <defaults>
</compile_context>

<pallas_src>
import math

import jax
import jax.numpy as jnp
import numpy as np
from jax import lax
from jax.experimental import pallas as pl
from jax.experimental.pallas import tpu as pltpu

# ----------------------------- configuration --------------------------------
NUM_HEADS = 4
HIDDEN = 32
FF_DIM = 64
SEQ = 8
BATCH = 2
QKV_DIM = HIDDEN // NUM_HEADS
TOKENS = BATCH * SEQ
LN_EPS = 1e-5
F32 = jnp.float32


# ------------------------------- helpers -------------------------------------
def _layernorm(y, gamma, beta):
    mean = jnp.mean(y, axis=-1, keepdims=True)
    var = jnp.mean((y - mean) ** 2, axis=-1, keepdims=True)
    return (y - mean) * lax.rsqrt(var + LN_EPS) * gamma + beta


def _gelu_exact(x):
    # PyTorch F.gelu default = exact (erf) formulation.
    return 0.5 * x * (1.0 + lax.erf(x / jnp.sqrt(2.0).astype(x.dtype)))


# ------------------------------- kernel -------------------------------------
def transformer_block_kernel(
    x_ref, xT_ref, bias_ref,
    wq_ref, bq_ref, wkvT_ref, bkvT_ref, wo_ref, bo_ref,
    g1_ref, be1_ref,
    w1_ref, b1_ref, w2_ref, b2_ref,
    g2_ref, be2_ref,
    o_ref,
):
    x = x_ref[...]                                    # (T, D) residual stream
    xT = xT_ref[...]                                  # (D, T)

    # ---- Q projection (standard orientation; 1/sqrt(dk) folded into weights)
    q = jnp.dot(x, wq_ref[...], preferred_element_type=F32) + bq_ref[...]      # (T, D)

    # ---- K/V projections in transposed orientation: heads become a free
    #      leading-dim index after a sublane-aligned reshape (no lane slicing).
    kvT = jnp.dot(wkvT_ref[...], xT, preferred_element_type=F32) + bkvT_ref[...]   # (2D, T)
    kvT = kvT.reshape(2 * NUM_HEADS, QKV_DIM, TOKENS)  # [K heads | V heads], free split

    bias = bias_ref[...]                              # (T, T): -1e30 masked / cross-batch

    dn_std = (((1,), (0,)), ((), ()))                 # A @ B
    dn_tb = (((1,), (1,)), ((), ()))                  # A @ B^T

    # ---- scores for all heads over all B*S tokens; one batched softmax ------
    s = jnp.stack(
        [lax.dot_general(q[:, h * QKV_DIM:(h + 1) * QKV_DIM], kvT[h],
                         dn_std, preferred_element_type=F32)
         for h in range(NUM_HEADS)], axis=0)          # (H, T, T)
    s = s + bias[None, :, :]

    s_max = jnp.max(s, axis=-1, keepdims=True)
    p = jnp.exp(s - s_max)
    p = p / jnp.sum(p, axis=-1, keepdims=True)        # exact reciprocal

    # ---- attention-apply + output projection, head-merge folded into wo -----
    a_out = bo_ref[...]                               # (1, D) broadcasts up
    for h in range(NUM_HEADS):
        ctx_h = lax.dot_general(p[h], kvT[NUM_HEADS + h], dn_tb,
                                preferred_element_type=F32)          # (T, dk)
        a_out = a_out + lax.dot_general(ctx_h, wo_ref[h], dn_std,
                                        preferred_element_type=F32)  # (T, D)

    # ---- residual + LayerNorm ------------------------------------------------
    x1 = _layernorm(x + a_out, g1_ref[...], be1_ref[...])

    # ---- MLP -----------------------------------------------------------------
    h1 = jnp.dot(x1, w1_ref[...], preferred_element_type=F32) + b1_ref[...]
    h1 = _gelu_exact(h1)
    mlp = jnp.dot(h1, w2_ref[...], preferred_element_type=F32) + b2_ref[...]

    # ---- residual + LayerNorm ------------------------------------------------
    o_ref[...] = _layernorm(x1 + mlp, g2_ref[...], be2_ref[...])


# ----------------------- one-time parameter preparation ----------------------
def prepare_params(params):
    """Fuse / rearrange weights once, outside the per-call path."""
    scale = jnp.float32(1.0 / math.sqrt(float(QKV_DIM)))
    return {
        "wq": params["wq"] * scale,                                   # (D, D)
        "bq": params["bq"] * scale,                                   # (1, D)
        "wkvT": jnp.concatenate([params["wk"].T, params["wv"].T], 0), # (2D, D)
        "bkvT": jnp.concatenate([params["bk"].T, params["bv"].T], 0), # (2D, 1)
        "wo_h": params["wo"].reshape(NUM_HEADS, QKV_DIM, HIDDEN),     # (H, dk, D)
        "bo": params["bo"],
        "g1": params["g1"], "be1": params["be1"],
        "w1": params["w1"], "b1": params["b1"],
        "w2": params["w2"], "b2": params["b2"],
        "g2": params["g2"], "be2": params["be2"],
    }


# ------------------------------- wrapper -------------------------------------
@jax.jit
def transformer_block(x, mask, prep):
    B, S, D = x.shape
    x2d = x.reshape(B * S, D)
    xT = x2d.T

    # Additive attention bias over all B*S tokens: -1e30 where the mask is 0
    # and on every cross-batch (q, k) pair; 0 elsewhere.  Computed once per
    # call, outside the kernel.
    neg = jnp.float32(-1e30)
    block = mask[:, :, None, :] * jnp.eye(B, dtype=mask.dtype)[:, None, :, None]
    bias = jnp.where(block.reshape(B * S, B * S) == 0, neg,
                     jnp.float32(0.0)).astype(jnp.float32)

    inputs = [
        x2d, xT, bias,
        prep["wq"], prep["bq"], prep["wkvT"], prep["bkvT"],
        prep["wo_h"], prep["bo"],
        prep["g1"], prep["be1"],
        prep["w1"], prep["b1"], prep["w2"], prep["b2"],
        prep["g2"], prep["be2"],
    ]

    vmem = pl.BlockSpec(memory_space=pltpu.MemorySpace.VMEM)
    out = pl.pallas_call(
        transformer_block_kernel,
        out_shape=jax.ShapeDtypeStruct((B * S, D), jnp.float32),
        in_specs=[vmem] * len(inputs),
        out_specs=vmem,
    )(*inputs)
    return out.reshape(B, S, D)


# --------------------------- reference (plain JAX) ----------------------------
def reference_forward(x, mask, p):
    def ln(y, g, b):
        mu = jnp.mean(y, -1, keepdims=True)
        var = jnp.mean((y - mu) ** 2, -1, keepdims=True)
        return (y - mu) / jnp.sqrt(var + LN_EPS) * g + b

    B, S, D = x.shape
    q = x @ p["wq"] + p["bq"]
    k = x @ p["wk"] + p["bk"]
    v = x @ p["wv"] + p["bv"]
    q = q.reshape(B, S, NUM_HEADS, QKV_DIM).transpose(0, 2, 1, 3)
    k = k.reshape(B, S, NUM_HEADS, QKV_DIM).transpose(0, 2, 1, 3)
    v = v.reshape(B, S, NUM_HEADS, QKV_DIM).transpose(0, 2, 1, 3)
    s = jnp.einsum("bhqd,bhkd->bhqk", q, k) / math.sqrt(float(QKV_DIM))
    s = jnp.where(mask[:, None, :, :] == 0, -jnp.inf, s)
    attn = jax.nn.softmax(s, axis=-1)
    o = jnp.einsum("bhqk,bhkd->bhqd", attn, v)
    o = o.transpose(0, 2, 1, 3).reshape(B, S, D)
    a_out = o @ p["wo"] + p["bo"]
    x1 = ln(x + a_out, p["g1"], p["be1"])
    h1 = x1 @ p["w1"] + p["b1"]
    h1 = 0.5 * h1 * (1.0 + jax.lax.erf(h1 / jnp.sqrt(2.0)))
    mlp = h1 @ p["w2"] + p["b2"]
    return ln(x1 + mlp, p["g2"], p["be2"])


# ---------------------------------- main --------------------------------------
if __name__ == "__main__":
    key = jax.random.PRNGKey(0)
    ks = jax.random.split(key, 12)

    def lin_w(k, fan_in, fan_out):
        return jax.random.normal(k, (fan_in, fan_out), jnp.float32) * 0.05

    params = {
        "wq": lin_w(ks[0], HIDDEN, HIDDEN), "bq": jnp.zeros((1, HIDDEN), jnp.float32) + 0.01,
        "wk": lin_w(ks[1], HIDDEN, HIDDEN), "bk": jnp.zeros((1, HIDDEN), jnp.float32) - 0.01,
        "wv": lin_w(ks[2], HIDDEN, HIDDEN), "bv": jnp.zeros((1, HIDDEN), jnp.float32) + 0.02,
        "wo": lin_w(ks[3], HIDDEN, HIDDEN), "bo": jnp.zeros((1, HIDDEN), jnp.float32),
        "g1": jnp.ones((1, HIDDEN), jnp.float32), "be1": jnp.zeros((1, HIDDEN), jnp.float32),
        "w1": lin_w(ks[4], HIDDEN, FF_DIM), "b1": jnp.zeros((1, FF_DIM), jnp.float32) + 0.03,
        "w2": lin_w(ks[5], FF_DIM, HIDDEN), "b2": jnp.zeros((1, HIDDEN), jnp.float32) - 0.02,
        "g2": jnp.ones((1, HIDDEN), jnp.float32), "be2": jnp.zeros((1, HIDDEN), jnp.float32),
    }

    x = jax.random.normal(ks[6], (BATCH, SEQ, HIDDEN), jnp.float32)
    # causal mask — exercises the masked (bias = -1e30) path
    mask = jnp.tril(jnp.ones((SEQ, SEQ), jnp.float32))[None].repeat(BATCH, axis=0)

    prep = prepare_params(params)            # one-time weight fusion (not per call)

    out = transformer_block(x, mask, prep)
    out = jax.block_until_ready(out)

    ref = reference_forward(x, mask, params)
    np.testing.assert_allclose(np.asarray(out), np.asarray(ref), rtol=1e-4, atol=1e-4)

    print("KERNEL_OK")
</pallas_src>

<mosaic_0001>
module attributes {stable_mosaic.version = 11 : i64} {
  func.func @transformer_block_kernel(%arg0: memref<16x32xf32, #tpu.memory_space<vmem>>, %arg1: memref<32x16xf32, #tpu.memory_space<vmem>>, %arg2: memref<16x16xf32, #tpu.memory_space<vmem>>, %arg3: memref<32x32xf32, #tpu.memory_space<vmem>>, %arg4: memref<1x32xf32, #tpu.memory_space<vmem>>, %arg5: memref<64x32xf32, #tpu.memory_space<vmem>>, %arg6: memref<64x1xf32, #tpu.memory_space<vmem>>, %arg7: memref<4x8x32xf32, #tpu.memory_space<vmem>>, %arg8: memref<1x32xf32, #tpu.memory_space<vmem>>, %arg9: memref<1x32xf32, #tpu.memory_space<vmem>>, %arg10: memref<1x32xf32, #tpu.memory_space<vmem>>, %arg11: memref<32x64xf32, #tpu.memory_space<vmem>>, %arg12: memref<1x64xf32, #tpu.memory_space<vmem>>, %arg13: memref<64x32xf32, #tpu.memory_space<vmem>>, %arg14: memref<1x32xf32, #tpu.memory_space<vmem>>, %arg15: memref<1x32xf32, #tpu.memory_space<vmem>>, %arg16: memref<1x32xf32, #tpu.memory_space<vmem>>, %arg17: memref<16x32xf32, #tpu.memory_space<vmem>>) attributes {dimension_semantics = [], scalar_prefetch = 0 : i64, scratch_operands = 0 : i64, tpu.core_type = #tpu.core_type<tc>} {
    %c0 = arith.constant 0 : index
    %c0_0 = arith.constant 0 : index
    %0 = vector.load %arg0[%c0, %c0_0] : memref<16x32xf32, #tpu.memory_space<vmem>>, vector<16x32xf32>
    %c0_1 = arith.constant 0 : index
    %c0_2 = arith.constant 0 : index
    %1 = vector.load %arg1[%c0_1, %c0_2] : memref<32x16xf32, #tpu.memory_space<vmem>>, vector<32x16xf32>
    %c0_3 = arith.constant 0 : index
    %c0_4 = arith.constant 0 : index
    %2 = vector.load %arg3[%c0_3, %c0_4] : memref<32x32xf32, #tpu.memory_space<vmem>>, vector<32x32xf32>
    %cst = arith.constant dense<0.000000e+00> : vector<16x32xf32>
    %3 = tpu.matmul %0, %2, %cst {dimension_numbers = #tpu.dot_dimension_numbers<[1], [0], [0], [1], [0, 0, 1, 1], [], []>} : vector<16x32xf32>, vector<32x32xf32>, vector<16x32xf32> -> vector<16x32xf32>
    %c0_5 = arith.constant 0 : index
    %c0_6 = arith.constant 0 : index
    %4 = vector.load %arg4[%c0_5, %c0_6] : memref<1x32xf32, #tpu.memory_space<vmem>>, vector<1x32xf32>
    %5 = vector.broadcast %4 : vector<1x32xf32> to vector<16x32xf32>
    %6 = arith.addf %3, %5 : vector<16x32xf32>
    %c0_7 = arith.constant 0 : index
    %c0_8 = arith.constant 0 : index
    %7 = vector.load %arg5[%c0_7, %c0_8] : memref<64x32xf32, #tpu.memory_space<vmem>>, vector<64x32xf32>
    %cst_9 = arith.constant dense<0.000000e+00> : vector<64x16xf32>
    %8 = tpu.matmul %7, %1, %cst_9 {dimension_numbers = #tpu.dot_dimension_numbers<[1], [0], [0], [1], [0, 0, 1, 1], [], []>} : vector<64x32xf32>, vector<32x16xf32>, vector<64x16xf32> -> vector<64x16xf32>
    %c0_10 = arith.constant 0 : index
    %c0_11 = arith.constant 0 : index
    %9 = vector.load %arg6[%c0_10, %c0_11] : memref<64x1xf32, #tpu.memory_space<vmem>>, vector<64x1xf32>
    %10 = vector.broadcast %9 : vector<64x1xf32> to vector<64x16xf32>
    %11 = arith.addf %8, %10 : vector<64x16xf32>
    %12 = vector.shape_cast %11 : vector<64x16xf32> to vector<8x8x16xf32>
    %c0_12 = arith.constant 0 : index
    %c0_13 = arith.constant 0 : index
    %13 = vector.load %arg2[%c0_12, %c0_13] : memref<16x16xf32, #tpu.memory_space<vmem>>, vector<16x16xf32>
    %14 = vector.extract_strided_slice %6 {offsets = [0, 0], sizes = [16, 8], strides = [1, 1]} : vector<16x32xf32> to vector<16x8xf32>
    %15 = vector.extract_strided_slice %12 {offsets = [0, 0, 0], sizes = [1, 8, 16], strides = [1, 1, 1]} : vector<8x8x16xf32> to vector<1x8x16xf32>
    %16 = vector.shape_cast %15 : vector<1x8x16xf32> to vector<8x16xf32>
    %cst_14 = arith.constant dense<0.000000e+00> : vector<16x16xf32>
    %17 = tpu.matmul %14, %16, %cst_14 {dimension_numbers = #tpu.dot_dimension_numbers<[1], [0], [0], [1], [0, 0, 1, 1], [], []>} : vector<16x8xf32>, vector<8x16xf32>, vector<16x16xf32> -> vector<16x16xf32>
    %18 = vector.extract_strided_slice %6 {offsets = [0, 8], sizes = [16, 8], strides = [1, 1]} : vector<16x32xf32> to vector<16x8xf32>
    %19 = vector.extract_strided_slice %12 {offsets = [1, 0, 0], sizes = [1, 8, 16], strides = [1, 1, 1]} : vector<8x8x16xf32> to vector<1x8x16xf32>
    %20 = vector.shape_cast %19 : vector<1x8x16xf32> to vector<8x16xf32>
    %cst_15 = arith.constant dense<0.000000e+00> : vector<16x16xf32>
    %21 = tpu.matmul %18, %20, %cst_15 {dimension_numbers = #tpu.dot_dimension_numbers<[1], [0], [0], [1], [0, 0, 1, 1], [], []>} : vector<16x8xf32>, vector<8x16xf32>, vector<16x16xf32> -> vector<16x16xf32>
    %22 = vector.extract_strided_slice %6 {offsets = [0, 16], sizes = [16, 8], strides = [1, 1]} : vector<16x32xf32> to vector<16x8xf32>
    %23 = vector.extract_strided_slice %12 {offsets = [2, 0, 0], sizes = [1, 8, 16], strides = [1, 1, 1]} : vector<8x8x16xf32> to vector<1x8x16xf32>
    %24 = vector.shape_cast %23 : vector<1x8x16xf32> to vector<8x16xf32>
    %cst_16 = arith.constant dense<0.000000e+00> : vector<16x16xf32>
    %25 = tpu.matmul %22, %24, %cst_16 {dimension_numbers = #tpu.dot_dimension_numbers<[1], [0], [0], [1], [0, 0, 1, 1], [], []>} : vector<16x8xf32>, vector<8x16xf32>, vector<16x16xf32> -> vector<16x16xf32>
    %26 = vector.extract_strided_slice %6 {offsets = [0, 24], sizes = [16, 8], strides = [1, 1]} : vector<16x32xf32> to vector<16x8xf32>
    %27 = vector.extract_strided_slice %12 {offsets = [3, 0, 0], sizes = [1, 8, 16], strides = [1, 1, 1]} : vector<8x8x16xf32> to vector<1x8x16xf32>
    %28 = vector.shape_cast %27 : vector<1x8x16xf32> to vector<8x16xf32>
    %cst_17 = arith.constant dense<0.000000e+00> : vector<16x16xf32>
    %29 = tpu.matmul %26, %28, %cst_17 {dimension_numbers = #tpu.dot_dimension_numbers<[1], [0], [0], [1], [0, 0, 1, 1], [], []>} : vector<16x8xf32>, vector<8x16xf32>, vector<16x16xf32> -> vector<16x16xf32>
    %30 = vector.shape_cast %17 : vector<16x16xf32> to vector<1x16x16xf32>
    %31 = vector.shape_cast %21 : vector<16x16xf32> to vector<1x16x16xf32>
    %32 = vector.shape_cast %25 : vector<16x16xf32> to vector<1x16x16xf32>
    %33 = vector.shape_cast %29 : vector<16x16xf32> to vector<1x16x16xf32>
    %34 = tpu.concatenate %30, %31, %32, %33 in 0 : vector<1x16x16xf32>, vector<1x16x16xf32>, vector<1x16x16xf32>, vector<1x16x16xf32> -> vector<4x16x16xf32>
    %35 = vector.shape_cast %13 : vector<16x16xf32> to vector<1x16x16xf32>
    %36 = vector.broadcast %35 : vector<1x16x16xf32> to vector<4x16x16xf32>
    %37 = arith.addf %34, %36 : vector<4x16x16xf32>
    %cst_18 = arith.constant dense<0xFF800000> : vector<4x16xf32>
    %38 = vector.multi_reduction <maximumf>, %37, %cst_18 [2] : vector<4x16x16xf32> to vector<4x16xf32>
    %39 = vector.shape_cast %38 : vector<4x16xf32> to vector<4x16x1xf32>
    %40 = vector.broadcast %39 : vector<4x16x1xf32> to vector<4x16x16xf32>
    %41 = arith.subf %37, %40 : vector<4x16x16xf32>
    %42 = math.exp %41 : vector<4x16x16xf32>
    %cst_19 = arith.constant dense<0.000000e+00> : vector<4x16xf32>
    %43 = vector.multi_reduction <add>, %42, %cst_19 [2] : vector<4x16x16xf32> to vector<4x16xf32>
    %44 = vector.shape_cast %43 : vector<4x16xf32> to vector<4x16x1xf32>
    %45 = vector.broadcast %44 : vector<4x16x1xf32> to vector<4x16x16xf32>
    %46 = arith.divf %42, %45 : vector<4x16x16xf32>
    %c0_20 = arith.constant 0 : index
    %c0_21 = arith.constant 0 : index
    %47 = vector.load %arg8[%c0_20, %c0_21] : memref<1x32xf32, #tpu.memory_space<vmem>>, vector<1x32xf32>
    %48 = vector.extract_strided_slice %46 {offsets = [0, 0, 0], sizes = [1, 16, 16], strides = [1, 1, 1]} : vector<4x16x16xf32> to vector<1x16x16xf32>
    %49 = vector.shape_cast %48 : vector<1x16x16xf32> to vector<16x16xf32>
    %50 = vector.extract_strided_slice %12 {offsets = [4, 0, 0], sizes = [1, 8, 16], strides = [1, 1, 1]} : vector<8x8x16xf32> to vector<1x8x16xf32>
    %51 = vector.shape_cast %50 : vector<1x8x16xf32> to vector<8x16xf32>
    %cst_22 = arith.constant dense<0.000000e+00> : vector<16x8xf32>
    %52 = tpu.matmul %49, %51, %cst_22 {dimension_numbers = #tpu.dot_dimension_numbers<[1], [1], [0], [0], [0, 0, 1, 0], [], []>} : vector<16x16xf32>, vector<8x16xf32>, vector<16x8xf32> -> vector<16x8xf32>
    %c0_23 = arith.constant 0 : index
    %c0_24 = arith.constant 0 : index
    %c0_25 = arith.constant 0 : index
    %53 = vector.load %arg7[%c0_23, %c0_24, %c0_25] : memref<4x8x32xf32, #tpu.memory_space<vmem>>, vector<1x8x32xf32>
    %54 = vector.shape_cast %53 : vector<1x8x32xf32> to vector<8x32xf32>
    %cst_26 = arith.constant dense<0.000000e+00> : vector<16x32xf32>
    %55 = tpu.matmul %52, %54, %cst_26 {dimension_numbers = #tpu.dot_dimension_numbers<[1], [0], [0], [1], [0, 0, 1, 1], [], []>} : vector<16x8xf32>, vector<8x32xf32>, vector<16x32xf32> -> vector<16x32xf32>
    %56 = vector.broadcast %47 : vector<1x32xf32> to vector<16x32xf32>
    %57 = arith.addf %56, %55 : vector<16x32xf32>
    %58 = vector.extract_strided_slice %46 {offsets = [1, 0, 0], sizes = [1, 16, 16], strides = [1, 1, 1]} : vector<4x16x16xf32> to vector<1x16x16xf32>
    %59 = vector.shape_cast %58 : vector<1x16x16xf32> to vector<16x16xf32>
    %60 = vector.extract_strided_slice %12 {offsets = [5, 0, 0], sizes = [1, 8, 16], strides = [1, 1, 1]} : vector<8x8x16xf32> to vector<1x8x16xf32>
    %61 = vector.shape_cast %60 : vector<1x8x16xf32> to vector<8x16xf32>
    %cst_27 = arith.constant dense<0.000000e+00> : vector<16x8xf32>
    %62 = tpu.matmul %59, %61, %cst_27 {dimension_numbers = #tpu.dot_dimension_numbers<[1], [1], [0], [0], [0, 0, 1, 0], [], []>} : vector<16x16xf32>, vector<8x16xf32>, vector<16x8xf32> -> vector<16x8xf32>
    %c1 = arith.constant 1 : index
    %c0_28 = arith.constant 0 : index
    %c0_29 = arith.constant 0 : index
    %63 = vector.load %arg7[%c1, %c0_28, %c0_29] : memref<4x8x32xf32, #tpu.memory_space<vmem>>, vector<1x8x32xf32>
    %64 = vector.shape_cast %63 : vector<1x8x32xf32> to vector<8x32xf32>
    %cst_30 = arith.constant dense<0.000000e+00> : vector<16x32xf32>
    %65 = tpu.matmul %62, %64, %cst_30 {dimension_numbers = #tpu.dot_dimension_numbers<[1], [0], [0], [1], [0, 0, 1, 1], [], []>} : vector<16x8xf32>, vector<8x32xf32>, vector<16x32xf32> -> vector<16x32xf32>
    %66 = arith.addf %57, %65 : vector<16x32xf32>
    %67 = vector.extract_strided_slice %46 {offsets = [2, 0, 0], sizes = [1, 16, 16], strides = [1, 1, 1]} : vector<4x16x16xf32> to vector<1x16x16xf32>
    %68 = vector.shape_cast %67 : vector<1x16x16xf32> to vector<16x16xf32>
    %69 = vector.extract_strided_slice %12 {offsets = [6, 0, 0], sizes = [1, 8, 16], strides = [1, 1, 1]} : vector<8x8x16xf32> to vector<1x8x16xf32>
    %70 = vector.shape_cast %69 : vector<1x8x16xf32> to vector<8x16xf32>
    %cst_31 = arith.constant dense<0.000000e+00> : vector<16x8xf32>
    %71 = tpu.matmul %68, %70, %cst_31 {dimension_numbers = #tpu.dot_dimension_numbers<[1], [1], [0], [0], [0, 0, 1, 0], [], []>} : vector<16x16xf32>, vector<8x16xf32>, vector<16x8xf32> -> vector<16x8xf32>
    %c2 = arith.constant 2 : index
    %c0_32 = arith.constant 0 : index
    %c0_33 = arith.constant 0 : index
    %72 = vector.load %arg7[%c2, %c0_32, %c0_33] : memref<4x8x32xf32, #tpu.memory_space<vmem>>, vector<1x8x32xf32>
    %73 = vector.shape_cast %72 : vector<1x8x32xf32> to vector<8x32xf32>
    %cst_34 = arith.constant dense<0.000000e+00> : vector<16x32xf32>
    %74 = tpu.matmul %71, %73, %cst_34 {dimension_numbers = #tpu.dot_dimension_numbers<[1], [0], [0], [1], [0, 0, 1, 1], [], []>} : vector<16x8xf32>, vector<8x32xf32>, vector<16x32xf32> -> vector<16x32xf32>
    %75 = arith.addf %66, %74 : vector<16x32xf32>
    %76 = vector.extract_strided_slice %46 {offsets = [3, 0, 0], sizes = [1, 16, 16], strides = [1, 1, 1]} : vector<4x16x16xf32> to vector<1x16x16xf32>
    %77 = vector.shape_cast %76 : vector<1x16x16xf32> to vector<16x16xf32>
    %78 = vector.extract_strided_slice %12 {offsets = [7, 0, 0], sizes = [1, 8, 16], strides = [1, 1, 1]} : vector<8x8x16xf32> to vector<1x8x16xf32>
    %79 = vector.shape_cast %78 : vector<1x8x16xf32> to vector<8x16xf32>
    %cst_35 = arith.constant dense<0.000000e+00> : vector<16x8xf32>
    %80 = tpu.matmul %77, %79, %cst_35 {dimension_numbers = #tpu.dot_dimension_numbers<[1], [1], [0], [0], [0, 0, 1, 0], [], []>} : vector<16x16xf32>, vector<8x16xf32>, vector<16x8xf32> -> vector<16x8xf32>
    %c3 = arith.constant 3 : index
    %c0_36 = arith.constant 0 : index
    %c0_37 = arith.constant 0 : index
    %81 = vector.load %arg7[%c3, %c0_36, %c0_37] : memref<4x8x32xf32, #tpu.memory_space<vmem>>, vector<1x8x32xf32>
    %82 = vector.shape_cast %81 : vector<1x8x32xf32> to vector<8x32xf32>
    %cst_38 = arith.constant dense<0.000000e+00> : vector<16x32xf32>
    %83 = tpu.matmul %80, %82, %cst_38 {dimension_numbers = #tpu.dot_dimension_numbers<[1], [0], [0], [1], [0, 0, 1, 1], [], []>} : vector<16x8xf32>, vector<8x32xf32>, vector<16x32xf32> -> vector<16x32xf32>
    %84 = arith.addf %75, %83 : vector<16x32xf32>
    %85 = arith.addf %0, %84 : vector<16x32xf32>
    %c0_39 = arith.constant 0 : index
    %c0_40 = arith.constant 0 : index
    %86 = vector.load %arg9[%c0_39, %c0_40] : memref<1x32xf32, #tpu.memory_space<vmem>>, vector<1x32xf32>
    %c0_41 = arith.constant 0 : index
    %c0_42 = arith.constant 0 : index
    %87 = vector.load %arg10[%c0_41, %c0_42] : memref<1x32xf32, #tpu.memory_space<vmem>>, vector<1x32xf32>
    %cst_43 = arith.constant dense<0.000000e+00> : vector<16xf32>
    %88 = vector.multi_reduction <add>, %85, %cst_43 [1] : vector<16x32xf32> to vector<16xf32>
    %89 = vector.shape_cast %88 : vector<16xf32> to vector<16x1xf32>
    %cst_44 = arith.constant 3.200000e+01 : f32
    %90 = vector.broadcast %cst_44 : f32 to vector<16x1xf32>
    %91 = arith.divf %89, %90 : vector<16x1xf32>
    %92 = vector.broadcast %91 : vector<16x1xf32> to vector<16x32xf32>
    %93 = arith.subf %85, %92 : vector<16x32xf32>
    %94 = arith.mulf %93, %93 : vector<16x32xf32>
    %cst_45 = arith.constant dense<0.000000e+00> : vector<16xf32>
    %95 = vector.multi_reduction <add>, %94, %cst_45 [1] : vector<16x32xf32> to vector<16xf32>
    %96 = vector.shape_cast %95 : vector<16xf32> to vector<16x1xf32>
    %cst_46 = arith.constant 3.200000e+01 : f32
    %97 = vector.broadcast %cst_46 : f32 to vector<16x1xf32>
    %98 = arith.divf %96, %97 : vector<16x1xf32>
    %99 = vector.broadcast %91 : vector<16x1xf32> to vector<16x32xf32>
    %100 = arith.subf %85, %99 : vector<16x32xf32>
    %cst_47 = arith.constant 9.99999974E-6 : f32
    %101 = vector.broadcast %cst_47 : f32 to vector<16x1xf32>
    %102 = arith.addf %98, %101 : vector<16x1xf32>
    %103 = math.rsqrt %102 : vector<16x1xf32>
    %104 = vector.broadcast %103 : vector<16x1xf32> to vector<16x32xf32>
    %105 = arith.mulf %100, %104 : vector<16x32xf32>
    %106 = vector.broadcast %86 : vector<1x32xf32> to vector<16x32xf32>
    %107 = arith.mulf %105, %106 : vector<16x32xf32>
    %108 = vector.broadcast %87 : vector<1x32xf32> to vector<16x32xf32>
    %109 = arith.addf %107, %108 : vector<16x32xf32>
    %c0_48 = arith.constant 0 : index
    %c0_49 = arith.constant 0 : index
    %110 = vector.load %arg11[%c0_48, %c0_49] : memref<32x64xf32, #tpu.memory_space<vmem>>, vector<32x64xf32>
    %cst_50 = arith.constant dense<0.000000e+00> : vector<16x64xf32>
    %111 = tpu.matmul %109, %110, %cst_50 {dimension_numbers = #tpu.dot_dimension_numbers<[1], [0], [0], [1], [0, 0, 1, 1], [], []>} : vector<16x32xf32>, vector<32x64xf32>, vector<16x64xf32> -> vector<16x64xf32>
    %c0_51 = arith.constant 0 : index
    %c0_52 = arith.constant 0 : index
    %112 = vector.load %arg12[%c0_51, %c0_52] : memref<1x64xf32, #tpu.memory_space<vmem>>, vector<1x64xf32>
    %113 = vector.broadcast %112 : vector<1x64xf32> to vector<16x64xf32>
    %114 = arith.addf %111, %113 : vector<16x64xf32>
    %cst_53 = arith.constant 5.000000e-01 : f32
    %115 = vector.broadcast %cst_53 : f32 to vector<16x64xf32>
    %116 = arith.mulf %115, %114 : vector<16x64xf32>
    %cst_54 = arith.constant 2.000000e+00 : f32
    %117 = math.sqrt %cst_54 : f32
    %118 = vector.broadcast %117 : f32 to vector<16x64xf32>
    %119 = arith.divf %114, %118 : vector<16x64xf32>
    %120 = math.erf %119 : vector<16x64xf32>
    %cst_55 = arith.constant 1.000000e+00 : f32
    %121 = vector.broadcast %cst_55 : f32 to vector<16x64xf32>
    %122 = arith.addf %121, %120 : vector<16x64xf32>
    %123 = arith.mulf %116, %122 : vector<16x64xf32>
    %c0_56 = arith.constant 0 : index
    %c0_57 = arith.constant 0 : index
    %124 = vector.load %arg13[%c0_56, %c0_57] : memref<64x32xf32, #tpu.memory_space<vmem>>, vector<64x32xf32>
    %cst_58 = arith.constant dense<0.000000e+00> : vector<16x32xf32>
    %125 = tpu.matmul %123, %124, %cst_58 {dimension_numbers = #tpu.dot_dimension_numbers<[1], [0], [0], [1], [0, 0, 1, 1], [], []>} : vector<16x64xf32>, vector<64x32xf32>, vector<16x32xf32> -> vector<16x32xf32>
    %c0_59 = arith.constant 0 : index
    %c0_60 = arith.constant 0 : index
    %126 = vector.load %arg14[%c0_59, %c0_60] : memref<1x32xf32, #tpu.memory_space<vmem>>, vector<1x32xf32>
    %127 = vector.broadcast %126 : vector<1x32xf32> to vector<16x32xf32>
    %128 = arith.addf %125, %127 : vector<16x32xf32>
    %129 = arith.addf %109, %128 : vector<16x32xf32>
    %c0_61 = arith.constant 0 : index
    %c0_62 = arith.constant 0 : index
    %130 = vector.load %arg15[%c0_61, %c0_62] : memref<1x32xf32, #tpu.memory_space<vmem>>, vector<1x32xf32>
    %c0_63 = arith.constant 0 : index
    %c0_64 = arith.constant 0 : index
    %131 = vector.load %arg16[%c0_63, %c0_64] : memref<1x32xf32, #tpu.memory_space<vmem>>, vector<1x32xf32>
    %cst_65 = arith.constant dense<0.000000e+00> : vector<16xf32>
    %132 = vector.multi_reduction <add>, %129, %cst_65 [1] : vector<16x32xf32> to vector<16xf32>
    %133 = vector.shape_cast %132 : vector<16xf32> to vector<16x1xf32>
    %cst_66 = arith.constant 3.200000e+01 : f32
    %134 = vector.broadcast %cst_66 : f32 to vector<16x1xf32>
    %135 = arith.divf %133, %134 : vector<16x1xf32>
    %136 = vector.broadcast %135 : vector<16x1xf32> to vector<16x32xf32>
    %137 = arith.subf %129, %136 : vector<16x32xf32>
    %138 = arith.mulf %137, %137 : vector<16x32xf32>
    %cst_67 = arith.constant dense<0.000000e+00> : vector<16xf32>
    %139 = vector.multi_reduction <add>, %138, %cst_67 [1] : vector<16x32xf32> to vector<16xf32>
    %140 = vector.shape_cast %139 : vector<16xf32> to vector<16x1xf32>
    %cst_68 = arith.constant 3.200000e+01 : f32
    %141 = vector.broadcast %cst_68 : f32 to vector<16x1xf32>
    %142 = arith.divf %140, %141 : vector<16x1xf32>
    %143 = vector.broadcast %135 : vector<16x1xf32> to vector<16x32xf32>
    %144 = arith.subf %129, %143 : vector<16x32xf32>
    %cst_69 = arith.constant 9.99999974E-6 : f32
    %145 = vector.broadcast %cst_69 : f32 to vector<16x1xf32>
    %146 = arith.addf %142, %145 : vector<16x1xf32>
    %147 = math.rsqrt %146 : vector<16x1xf32>
    %148 = vector.broadcast %147 : vector<16x1xf32> to vector<16x32xf32>
    %149 = arith.mulf %144, %148 : vector<16x32xf32>
    %150 = vector.broadcast %130 : vector<1x32xf32> to vector<16x32xf32>
    %151 = arith.mulf %149, %150 : vector<16x32xf32>
    %152 = vector.broadcast %131 : vector<1x32xf32> to vector<16x32xf32>
    %153 = arith.addf %151, %152 : vector<16x32xf32>
    %c0_70 = arith.constant 0 : index
    %c0_71 = arith.constant 0 : index
    %154 = vector.load %arg17[%c0_70, %c0_71] : memref<16x32xf32, #tpu.memory_space<vmem>>, vector<16x32xf32>
    tpu.vector_store %arg17[%c0_70, %c0_71], %153 {strides = array<i32>} : memref<16x32xf32, #tpu.memory_space<vmem>>, vector<16x32xf32>,
    return
  }
}

</mosaic_0001>

<llo_original>
// kernel: transformer_block.1
$region0: #{transformer_block.1}
  #allocation0 [shape = 'u32[]', space=smem, size = 0x4, offset = 0x4, fixed_abs, tag = 'smem constant byte address 0x4 - core index']
  #allocation1 [shape = 'u32[144,128]{1,0:T(1,128)}', space=vmem, size = 0x12000, scoped, tag = 'internal scratch']
  %s0 = inlined_call_operand.vmem [shape: f32[16,32], index: 0, kind: input, shape index: {}]
  %s1 = inlined_call_operand.vmem [shape: f32[32,16], index: 1, kind: input, shape index: {}]
  %s2 = inlined_call_operand.vmem [shape: f32[16,16], index: 2, kind: input, shape index: {}]
  %s3 = inlined_call_operand.vmem [shape: f32[32,32], index: 3, kind: input, shape index: {}]
  %s4 = inlined_call_operand.vmem [shape: f32[1,32], index: 4, kind: input, shape index: {}]
  %s5 = inlined_call_operand.vmem [shape: f32[64,32], index: 5, kind: input, shape index: {}]
  %s6 = inlined_call_operand.vmem [shape: f32[64,1], index: 6, kind: input, shape index: {}]
  %s7 = inlined_call_operand.vmem [shape: f32[4,8,32], index: 7, kind: input, shape index: {}]
  %s8 = inlined_call_operand.vmem [shape: f32[1,32], index: 8, kind: input, shape index: {}]
  %s9 = inlined_call_operand.vmem [shape: f32[1,32], index: 9, kind: input, shape index: {}]
  %s10 = inlined_call_operand.vmem [shape: f32[1,32], index: 10, kind: input, shape index: {}]
  %s11 = inlined_call_operand.vmem [shape: f32[32,64], index: 11, kind: input, shape index: {}]
  %s12 = inlined_call_operand.vmem [shape: f32[1,64], index: 12, kind: input, shape index: {}]
  %s13 = inlined_call_operand.vmem [shape: f32[64,32], index: 13, kind: input, shape index: {}]
  %s14 = inlined_call_operand.vmem [shape: f32[1,32], index: 14, kind: input, shape index: {}]
  %s15 = inlined_call_operand.vmem [shape: f32[1,32], index: 15, kind: input, shape index: {}]
  %s16 = inlined_call_operand.vmem [shape: f32[1,32], index: 16, kind: input, shape index: {}]
  %s17 = inlined_call_operand.hbm [shape: f32[16,32], index: 17, kind: output, shape index: {}]
  %s18 = sld [smem:[#allocation0]]
  $region78: #{transformer_block.1} parent=0
    _
  %s20 = ssub.s32 1, %s18
  %s21 = scalar_select 0, %s20, %s18
  $region1: #{transformer_block.1} parent=0
    #allocation2 [shape = 'u8[8192]{0}', space=vmem, size = 0x2000, scoped, tag = 'output window, operand 0, single buffered']
    #allocation3 [shape = 's32[1]{0}', space=sflag, size = 0x4, scoped, tag = 'scoped memory for transformer_block.1']
    %22 = vsyncpa [#allocation3], 0
    // Predicated region
    $region2: #{transformer_block.1} parent=1 // pred_check
      _
    $region3: #{transformer_block.1} parent=1 // pred_check_branch
      %24 = sbr.rel (0) target = $region5
    $region4: #{transformer_block.1} parent=1 // pred_region
      _
    $region5: #{transformer_block.1} parent=1 // pred_fallthru
      _
    // Predicated region
    $region6: #{transformer_block.1} parent=1 // pred_check
      _
    $region7: #{transformer_block.1} parent=1 // pred_check_branch
      %26 = sbr.rel (0) target = $region9
    $region8: #{transformer_block.1} parent=1 // pred_region
      _
    $region9: #{transformer_block.1} parent=1 // pred_fallthru
      _
    // Predicated region
    $region10: #{transformer_block.1} parent=1 // pred_check
      _
    $region11: #{transformer_block.1} parent=1 // pred_check_branch
      %28 = sbr.rel (0) target = $region13
    $region12: #{transformer_block.1} parent=1 // pred_region
      _
    $region13: #{transformer_block.1} parent=1 // pred_fallthru
      _
    // Predicated region
    $region14: #{transformer_block.1} parent=1 // pred_check
      _
    $region15: #{transformer_block.1} parent=1 // pred_check_branch
      %30 = sbr.rel (0) target = $region17
    $region16: #{transformer_block.1} parent=1 // pred_region
      _
    $region17: #{transformer_block.1} parent=1 // pred_fallthru
      _
    // Predicated region
    $region18: #{transformer_block.1} parent=1 // pred_check
      _
    $region19: #{transformer_block.1} parent=1 // pred_check_branch
      %32 = sbr.rel (0) target = $region21
    $region20: #{transformer_block.1} parent=1 // pred_region
      _
    $region21: #{transformer_block.1} parent=1 // pred_fallthru
      _
    // Predicated region
    $region22: #{transformer_block.1} parent=1 // pred_check
      _
    $region23: #{transformer_block.1} parent=1 // pred_check_branch
      %34 = sbr.rel (0) target = $region25
    $region24: #{transformer_block.1} parent=1 // pred_region
      _
    $region25: #{transformer_block.1} parent=1 // pred_fallthru
      _
    // Predicated region
    $region26: #{transformer_block.1} parent=1 // pred_check
      _
    $region27: #{transformer_block.1} parent=1 // pred_check_branch
      %36 = sbr.rel (0) target = $region29
    $region28: #{transformer_block.1} parent=1 // pred_region
      _
    $region29: #{transformer_block.1} parent=1 // pred_fallthru
      _
    // Predicated region
    $region30: #{transformer_block.1} parent=1 // pred_check
      _
    $region31: #{transformer_block.1} parent=1 // pred_check_branch
      %38 = sbr.rel (0) target = $region33
    $region32: #{transformer_block.1} parent=1 // pred_region
      _
    $region33: #{transformer_block.1} parent=1 // pred_fallthru
      _
    // Predicated region
    $region34: #{transformer_block.1} parent=1 // pred_check
      _
    $region35: #{transformer_block.1} parent=1 // pred_check_branch
      %40 = sbr.rel (0) target = $region37
    $region36: #{transformer_block.1} parent=1 // pred_region
      _
    $region37: #{transformer_block.1} parent=1 // pred_fallthru
      _
    // Predicated region
    $region38: #{transformer_block.1} parent=1 // pred_check
      _
    $region39: #{transformer_block.1} parent=1 // pred_check_branch
      %42 = sbr.rel (0) target = $region41
    $region40: #{transformer_block.1} parent=1 // pred_region
      _
    $region41: #{transformer_block.1} parent=1 // pred_fallthru
      _
    // Predicated region
    $region42: #{transformer_block.1} parent=1 // pred_check
      _
    $region43: #{transformer_block.1} parent=1 // pred_check_branch
      %44 = sbr.rel (0) target = $region45
    $region44: #{transformer_block.1} parent=1 // pred_region
      _
    $region45: #{transformer_block.1} parent=1 // pred_fallthru
      _
    // Predicated region
    $region46: #{transformer_block.1} parent=1 // pred_check
      _
    $region47: #{transformer_block.1} parent=1 // pred_check_branch
      %46 = sbr.rel (0) target = $region49
    $region48: #{transformer_block.1} parent=1 // pred_region
      _
    $region49: #{transformer_block.1} parent=1 // pred_fallthru
      _
    // Predicated region
    $region50: #{transformer_block.1} parent=1 // pred_check
      _
    $region51: #{transformer_block.1} parent=1 // pred_check_branch
      %48 = sbr.rel (0) target = $region53
    $region52: #{transformer_block.1} parent=1 // pred_region
      _
    $region53: #{transformer_block.1} parent=1 // pred_fallthru
      _
    // Predicated region
    $region54: #{transformer_block.1} parent=1 // pred_check
      _
    $region55: #{transformer_block.1} parent=1 // pred_check_branch
      %50 = sbr.rel (0) target = $region57
    $region56: #{transformer_block.1} parent=1 // pred_region
      _
    $region57: #{transformer_block.1} parent=1 // pred_fallthru
      _
    // Predicated region
    $region58: #{transformer_block.1} parent=1 // pred_check
      _
    $region59: #{transformer_block.1} parent=1 // pred_check_branch
      %52 = sbr.rel (0) target = $region61
    $region60: #{transformer_block.1} parent=1 // pred_region
      _
    $region61: #{transformer_block.1} parent=1 // pred_fallthru
      _
    // Predicated region
    $region62: #{transformer_block.1} parent=1 // pred_check
      _
    $region63: #{transformer_block.1} parent=1 // pred_check_branch
      %54 = sbr.rel (0) target = $region65
    $region64: #{transformer_block.1} parent=1 // pred_region
      _
    $region65: #{transformer_block.1} parent=1 // pred_fallthru
      _
    // Predicated region
    $region66: #{transformer_block.1} parent=1 // pred_check
      _
    $region67: #{transformer_block.1} parent=1 // pred_check_branch
      %56 = sbr.rel (0) target = $region69
    $region68: #{transformer_block.1} parent=1 // pred_region
      _
    $region69: #{transformer_block.1} parent=1 // pred_fallthru
      _
    %v57 = vld [vmem:[%s0] sm:$0xff]
    %v58 = vld [vmem:[%s0 + $0x8] sm:$0xff]
    %v59 = vld [vmem:[%s1] sm:$0xff]
    %v60 = vld [vmem:[%s1 + $0x8] sm:$0xff]
    %v61 = vld [vmem:[%s1 + $0x10] sm:$0xff]
    %v62 = vld [vmem:[%s1 + $0x18] sm:$0xff]
    %v63 = vld [vmem:[%s3] sm:$0xff]
    %v64 = vld [vmem:[%s3 + $0x8] sm:$0xff]
    %v65 = vld [vmem:[%s3 + $0x10] sm:$0xff]
    %v66 = vld [vmem:[%s3 + $0x18] sm:$0xff]
    %v67 = vld [vmem:[%s4] sm:$0x1]
    %v69 = vlaneseq
    %v70 = vshrl.u32 %v69, 7
    %v71 = vsub.s32 0, %v70
    %v72 = vrot.slane %v67, %v71
    %vm74 = vcmask 261120
    %v76 = vsel %vm74, %v57, 0
    %v79 = vsel %vm74, %v58, 0
    %81 = vmatprep.subr.mxu0 0.0
    %82 = vmatpush1.msra.mxu0 %v63
    %83 = vmatprep.subr.mxu0 0.0
    %84 = vmatpush1.msra.mxu0 %v64
    %85 = vmatprep.subr.mxu0 0.0
    %86 = vmatpush1.msra.mxu0 %v65
    %87 = vmatprep.subr.mxu0 0.0
    %88 = vmatpush1.msra.mxu0 %v66
    %89 = vmatprep.subr.mxu0 0.0
    %90 = vmatpush1.msra.mxu0 0.0
    %91 = vmatprep.subr.mxu0 0.0
    %92 = vmatpush1.msra.mxu0 0.0
    %93 = vmatprep.subr.mxu0 0.0
    %94 = vmatpush1.msra.mxu0 0.0
    %95 = vmatprep.subr.mxu0 0.0
    %96 = vmatpush1.msra.mxu0 0.0
    %97 = vmatprep.subr.mxu0 0.0
    %98 = vmatpush1.msra.mxu0 0.0
    %99 = vmatprep.subr.mxu0 0.0
    %100 = vmatpush1.msra.mxu0 0.0
    %101 = vmatprep.subr.mxu0 0.0
    %102 = vmatpush1.msra.mxu0 0.0
    %103 = vmatprep.subr.mxu0 0.0
    %104 = vmatpush1.msra.mxu0 0.0
    %105 = vmatprep.subr.mxu0 0.0
    %106 = vmatpush1.msra.mxu0 0.0
    %107 = vmatprep.subr.mxu0 0.0
    %108 = vmatpush1.msra.mxu0 0.0
    %109 = vmatprep.subr.mxu0 0.0
    %110 = vmatpush1.msra.mxu0 0.0
    %111 = vmatprep.subr.mxu0 0.0
    %112 = vmatpush1.msra.mxu0 0.0
    %113 = vmatprep.subr.mxu0 0.0
    %114 = vmatpush1.msra.mxu0 0.0
    %115 = vmatprep.subr.mxu0 0.0
    %116 = vmatpush1.msra.mxu0 0.0
    %117 = vmatprep.subr.mxu0 0.0
    %118 = vmatpush1.msra.mxu0 0.0
    %119 = vmatprep.subr.mxu0 0.0
    %120 = vmatpush1.msra.mxu0 0.0
    %121 = vmatprep.subr.mxu0 0.0
    %122 = vmatpush1.msra.mxu0 0.0
    %123 = vmatprep.subr.mxu0 0.0
    %124 = vmatpush1.msra.mxu0 0.0
    %125 = vmatprep.subr.mxu0 0.0
    %126 = vmatpush1.msra.mxu0 0.0
    %127 = vmatprep.subr.mxu0 0.0
    %128 = vmatpush1.msra.mxu0 0.0
    %129 = vmatprep.subr.mxu0 0.0
    %130 = vmatpush1.msra.mxu0 0.0
    %131 = vmatprep.subr.mxu0 0.0
    %132 = vmatpush1.msra.mxu0 0.0
    %133 = vmatprep.subr.mxu0 0.0
    %134 = vmatpush1.msra.mxu0 0.0
    %135 = vmatprep.subr.mxu0 0.0
    %136 = vmatpush1.msra.mxu0 0.0
    %137 = vmatprep.subr.mxu0 0.0
    %138 = vmatpush1.msra.mxu0 0.0
    %139 = vmatprep.subr.mxu0 0.0
    %140 = vmatpush1.msra.mxu0 0.0
    %141 = vmatprep.subr.mxu0 0.0
    %142 = vmatpush1.msra.mxu0 0.0
    %143 = vmatprep.subr.mxu0 0.0
    %144 = vmatpush1.msra.mxu0 0.0
    %145 = vmatprep.mubr.f32.mxu0 0.0
    %146 = vmatmul.mubr.f32.gmra.mrb[0].mxu0 %v76
    %v147 = vpop.f32.mrb[0].mxu0
    %v148 = vadd.f32 %v72, %v147
    %v149 = vpop.f32.mrb[0].mxu0
    %150 = vmatprep.mubr.f32.mxu0 0.0
    %151 = vmatmul.mubr.f32.gmra.mrb[0].mxu0 %v79
    %v152 = vpop.f32.mrb[0].mxu0
    %v153 = vadd.f32 %v72, %v152
    %v154 = vpop.f32.mrb[0].mxu0
    %155 = vdwg.mxu0
    %v156 = vld [vmem:[%s5] sm:$0xff]
    %v157 = vld [vmem:[%s5 + $0x8] sm:$0xff]
    %v158 = vld [vmem:[%s5 + $0x10] sm:$0xff]
    %v159 = vld [vmem:[%s5 + $0x18] sm:$0xff]
    %v160 = vld [vmem:[%s5 + $0x20] sm:$0xff]
    %v161 = vld [vmem:[%s5 + $0x28] sm:$0xff]
    %v162 = vld [vmem:[%s5 + $0x30] sm:$0xff]
    %v163 = vld [vmem:[%s5 + $0x38] sm:$0xff]
    %v164 = vld [vmem:[%s6] sm:$0xff]
    %v165 = vld [vmem:[%s6 + $0x8] sm:$0xff]
    %v166 = vld [vmem:[%s6 + $0x10] sm:$0xff]
    %v167 = vld [vmem:[%s6 + $0x18] sm:$0xff]
    %v168 = vld [vmem:[%s6 + $0x20] sm:$0xff]
    %v169 = vld [vmem:[%s6 + $0x28] sm:$0xff]
    %v170 = vld [vmem:[%s6 + $0x30] sm:$0xff]
    %v171 = vld [vmem:[%s6 + $0x38] sm:$0xff]
    %173 = vset.pattern.permute.xlu0 0
    %174 = vperm.xlu0 %173, %v164
    %v175 = vpop.permute.xlu0 %174
    %178 = vset.pattern.permute.xlu0 0
    %179 = vperm.xlu0 %178, %v165
    %v180 = vpop.permute.xlu0 %179
    %183 = vset.pattern.permute.xlu0 0
    %184 = vperm.xlu0 %183, %v166
    %v185 = vpop.permute.xlu0 %184
    %188 = vset.pattern.permute.xlu0 0
    %189 = vperm.xlu0 %188, %v167
    %v190 = vpop.permute.xlu0 %189
    %193 = vset.pattern.permute.xlu0 0
    %194 = vperm.xlu0 %193, %v168
    %v195 = vpop.permute.xlu0 %194
    %198 = vset.pattern.permute.xlu0 0
    %199 = vperm.xlu0 %198, %v169
    %v200 = vpop.permute.xlu0 %199
    %203 = vset.pattern.permute.xlu0 0
    %204 = vperm.xlu0 %203, %v170
    %v205 = vpop.permute.xlu0 %204
    %208 = vset.pattern.permute.xlu0 0
    %209 = vperm.xlu0 %208, %v171
    %v210 = vpop.permute.xlu0 %209
    %v213 = vsel %vm74, %v156, 0
    %v216 = vsel %vm74, %v157, 0
    %v219 = vsel %vm74, %v158, 0
    %v222 = vsel %vm74, %v159, 0
    %v225 = vsel %vm74, %v160, 0
    %v228 = vsel %vm74, %v161, 0
    %v231 = vsel %vm74, %v162, 0
    %v234 = vsel %vm74, %v163, 0
    %236 = vmatprep.subr.mxu0 0.0
    %237 = vmatpush1.msra.mxu0 %v59
    %238 = vmatprep.subr.mxu0 0.0
    %239 = vmatpush1.msra.mxu0 %v60
    %240 = vmatprep.subr.mxu0 0.0
    %241 = vmatpush1.msra.mxu0 %v61
    %242 = vmatprep.subr.mxu0 0.0
    %243 = vmatpush1.msra.mxu0 %v62
    %244 = vmatprep.subr.mxu0 0.0
    %245 = vmatpush1.msra.mxu0 0.0
    %246 = vmatprep.subr.mxu0 0.0
    %247 = vmatpush1.msra.mxu0 0.0
    %248 = vmatprep.subr.mxu0 0.0
    %249 = vmatpush1.msra.mxu0 0.0
    %250 = vmatprep.subr.mxu0 0.0
    %251 = vmatpush1.msra.mxu0 0.0
    %252 = vmatprep.subr.mxu0 0.0
    %253 = vmatpush1.msra.mxu0 0.0
    %254 = vmatprep.subr.mxu0 0.0
    %255 = vmatpush1.msra.mxu0 0.0
    %256 = vmatprep.subr.mxu0 0.0
    %257 = vmatpush1.msra.mxu0 0.0
    %258 = vmatprep.subr.mxu0 0.0
    %259 = vmatpush1.msra.mxu0 0.0
    %260 = vmatprep.subr.mxu0 0.0
    %261 = vmatpush1.msra.mxu0 0.0
    %262 = vmatprep.subr.mxu0 0.0
    %263 = vmatpush1.msra.mxu0 0.0
    %264 = vmatprep.subr.mxu0 0.0
    %265 = vmatpush1.msra.mxu0 0.0
    %266 = vmatprep.subr.mxu0 0.0
    %267 = vmatpush1.msra.mxu0 0.0
    %268 = vmatprep.subr.mxu0 0.0
    %269 = vmatpush1.msra.mxu0 0.0
    %270 = vmatprep.subr.mxu0 0.0
    %271 = vmatpush1.msra.mxu0 0.0
    %272 = vmatprep.subr.mxu0 0.0
    %273 = vmatpush1.msra.mxu0 0.0
    %274 = vmatprep.subr.mxu0 0.0
    %275 = vmatpush1.msra.mxu0 0.0
    %276 = vmatprep.subr.mxu0 0.0
    %277 = vmatpush1.msra.mxu0 0.0
    %278 = vmatprep.subr.mxu0 0.0
    %279 = vmatpush1.msra.mxu0 0.0
    %280 = vmatprep.subr.mxu0 0.0
    %281 = vmatpush1.msra.mxu0 0.0
    %282 = vmatprep.subr.mxu0 0.0
    %283 = vmatpush1.msra.mxu0 0.0
    %284 = vmatprep.subr.mxu0 0.0
    %285 = vmatpush1.msra.mxu0 0.0
    %286 = vmatprep.subr.mxu0 0.0
    %287 = vmatpush1.msra.mxu0 0.0
    %288 = vmatprep.subr.mxu0 0.0
    %289 = vmatpush1.msra.mxu0 0.0
    %290 = vmatprep.subr.mxu0 0.0
    %291 = vmatpush1.msra.mxu0 0.0
    %292 = vmatprep.subr.mxu0 0.0
    %293 = vmatpush1.msra.mxu0 0.0
    %294 = vmatprep.subr.mxu0 0.0
    %295 = vmatpush1.msra.mxu0 0.0
    %296 = vmatprep.subr.mxu0 0.0
    %297 = vmatpush1.msra.mxu0 0.0
    %298 = vmatprep.subr.mxu0 0.0
    %299 = vmatpush1.msra.mxu0 0.0
    %300 = vmatprep.mubr.f32.mxu0 0.0
    %301 = vmatmul.mubr.f32.gmra.mrb[0].mxu0 %v213
    %v302 = vpop.f32.mrb[0].mxu0
    %v303 = vadd.f32 %v175, %v302
    %v304 = vpop.f32.mrb[0].mxu0
    %305 = vmatprep.mubr.f32.mxu0 0.0
    %306 = vmatmul.mubr.f32.gmra.mrb[0].mxu0 %v216
    %v307 = vpop.f32.mrb[0].mxu0
    %v308 = vadd.f32 %v180, %v307
    %v309 = vpop.f32.mrb[0].mxu0
    %310 = vmatprep.mubr.f32.mxu0 0.0
    %311 = vmatmul.mubr.f32.gmra.mrb[0].mxu0 %v219
    %v312 = vpop.f32.mrb[0].mxu0
    %v313 = vadd.f32 %v185, %v312
    %v314 = vpop.f32.mrb[0].mxu0
    %315 = vmatprep.mubr.f32.mxu0 0.0
    %316 = vmatmul.mubr.f32.gmra.mrb[0].mxu0 %v222
    %v317 = vpop.f32.mrb[0].mxu0
    %v318 = vadd.f32 %v190, %v317
    %v319 = vpop.f32.mrb[0].mxu0
    %320 = vmatprep.mubr.f32.mxu0 0.0
    %321 = vmatmul.mubr.f32.gmra.mrb[0].mxu0 %v225
    %v322 = vpop.f32.mrb[0].mxu0
    %v323 = vadd.f32 %v195, %v322
    %v324 = vpop.f32.mrb[0].mxu0
    %325 = vmatprep.mubr.f32.mxu0 0.0
    %326 = vmatmul.mubr.f32.gmra.mrb[0].mxu0 %v228
    %v327 = vpop.f32.mrb[0].mxu0
    %v328 = vadd.f32 %v200, %v327
    %v329 = vpop.f32.mrb[0].mxu0
    %330 = vmatprep.mubr.f32.mxu0 0.0
    %331 = vmatmul.mubr.f32.gmra.mrb[0].mxu0 %v231
    %v332 = vpop.f32.mrb[0].mxu0
    %v333 = vadd.f32 %v205, %v332
    %v334 = vpop.f32.mrb[0].mxu0
    %335 = vmatprep.mubr.f32.mxu0 0.0
    %336 = vmatmul.mubr.f32.gmra.mrb[0].mxu0 %v234
    %v337 = vpop.f32.mrb[0].mxu0
    %v338 = vadd.f32 %v210, %v337
    %v339 = vpop.f32.mrb[0].mxu0
    %340 = vdwg.mxu0
    %v341 = vld [vmem:[%s2] sm:$0xff]
    %v342 = vld [vmem:[%s2 + $0x8] sm:$0xff]
    %vm343 = vcmask 64512
    %v345 = vsel %vm343, %v148, 0
    %v348 = vsel %vm343, %v153, 0
    %350 = vmatprep.subr.mxu0 0.0
    %351 = vmatpush1.msra.mxu0 %v303
    %352 = vmatprep.subr.mxu0 0.0
    %353 = vmatpush1.msra.mxu0 0.0
    %354 = vmatprep.subr.mxu0 0.0
    %355 = vmatpush1.msra.mxu0 0.0
    %356 = vmatprep.subr.mxu0 0.0
    %357 = vmatpush1.msra.mxu0 0.0
    %358 = vmatprep.subr.mxu0 0.0
    %359 = vmatpush1.msra.mxu0 0.0
    %360 = vmatprep.subr.mxu0 0.0
    %361 = vmatpush1.msra.mxu0 0.0
    %362 = vmatprep.subr.mxu0 0.0
    %363 = vmatpush1.msra.mxu0 0.0
    %364 = vmatprep.subr.mxu0 0.0
    %365 = vmatpush1.msra.mxu0 0.0
    %366 = vmatprep.subr.mxu0 0.0
    %367 = vmatpush1.msra.mxu0 0.0
    %368 = vmatprep.subr.mxu0 0.0
    %369 = vmatpush1.msra.mxu0 0.0
    %370 = vmatprep.subr.mxu0 0.0
    %371 = vmatpush1.msra.mxu0 0.0
    %372 = vmatprep.subr.mxu0 0.0
    %373 = vmatpush1.msra.mxu0 0.0
    %374 = vmatprep.subr.mxu0 0.0
    %375 = vmatpush1.msra.mxu0 0.0
    %376 = vmatprep.subr.mxu0 0.0
    %377 = vmatpush1.msra.mxu0 0.0
    %378 = vmatprep.subr.mxu0 0.0
    %379 = vmatpush1.msra.mxu0 0.0
    %380 = vmatprep.subr.mxu0 0.0
    %381 = vmatpush1.msra.mxu0 0.0
    %382 = vmatprep.subr.mxu0 0.0
    %383 = vmatpush1.msra.mxu0 0.0
    %384 = vmatprep.subr.mxu0 0.0
    %385 = vmatpush1.msra.mxu0 0.0
    %386 = vmatprep.subr.mxu0 0.0
    %387 = vmatpush1.msra.mxu0 0.0
    %388 = vmatprep.subr.mxu0 0.0
    %389 = vmatpush1.msra.mxu0 0.0
    %390 = vmatprep.subr.mxu0 0.0
    %391 = vmatpush1.msra.mxu0 0.0
    %392 = vmatprep.subr.mxu0 0.0
    %393 = vmatpush1.msra.mxu0 0.0
    %394 = vmatprep.subr.mxu0 0.0
    %395 = vmatpush1.msra.mxu0 0.0
    %396 = vmatprep.subr.mxu0 0.0
    %397 = vmatpush1.msra.mxu0 0.0
    %398 = vmatprep.subr.mxu0 0.0
    %399 = vmatpush1.msra.mxu0 0.0
    %400 = vmatprep.subr.mxu0 0.0
    %401 = vmatpush1.msra.mxu0 0.0
    %402 = vmatprep.subr.mxu0 0.0
    %403 = vmatpush1.msra.mxu0 0.0
    %404 = vmatprep.subr.mxu0 0.0
    %405 = vmatpush1.msra.mxu0 0.0
    %406 = vmatprep.subr.mxu0 0.0
    %407 = vmatpush1.msra.mxu0 0.0
    %408 = vmatprep.subr.mxu0 0.0
    %409 = vmatpush1.msra.mxu0 0.0
    %410 = vmatprep.subr.mxu0 0.0
    %411 = vmatpush1.msra.mxu0 0.0
    %412 = vmatprep.subr.mxu0 0.0
    %413 = vmatpush1.msra.mxu0 0.0
    %414 = vmatprep.mubr.f32.mxu0 0.0
    %415 = vmatmul.mubr.f32.gmra.mrb[0].mxu0 %v345
    %v416 = vpop.f32.mrb[0].mxu0
    %v417 = vadd.f32 0.0, %v416
    %v418 = vpop.f32.mrb[0].mxu0
    %419 = vmatprep.mubr.f32.mxu0 0.0
    %420 = vmatmul.mubr.f32.gmra.mrb[0].mxu0 %v348
    %v421 = vpop.f32.mrb[0].mxu0
    %v422 = vadd.f32 0.0, %v421
    %v423 = vpop.f32.mrb[0].mxu0
    %424 = vdwg.mxu0
    %425 = vrot.lane.b32.xlu0 %v148, 120
    %v426 = vpop.permute.xlu0 %425
    %427 = vrot.lane.b32.xlu0 %v153, 120
    %v428 = vpop.permute.xlu0 %427
    %v429 = vsel %vm343, %v426, 0
    %v431 = vsel %vm343, %v428, 0
    %433 = vmatprep.subr.mxu0 0.0
    %434 = vmatpush1.msra.mxu0 %v308
    %435 = vmatprep.subr.mxu0 0.0
    %436 = vmatpush1.msra.mxu0 0.0
    %437 = vmatprep.subr.mxu0 0.0
    %438 = vmatpush1.msra.mxu0 0.0
    %439 = vmatprep.subr.mxu0 0.0
    %440 = vmatpush1.msra.mxu0 0.0
    %441 = vmatprep.subr.mxu0 0.0
    %442 = vmatpush1.msra.mxu0 0.0
    %443 = vmatprep.subr.mxu0 0.0
    %444 = vmatpush1.msra.mxu0 0.0
    %445 = vmatprep.subr.mxu0 0.0
    %446 = vmatpush1.msra.mxu0 0.0
    %447 = vmatprep.subr.mxu0 0.0
    %448 = vmatpush1.msra.mxu0 0.0
    %449 = vmatprep.subr.mxu0 0.0
    %450 = vmatpush1.msra.mxu0 0.0
    %451 = vmatprep.subr.mxu0 0.0
    %452 = vmatpush1.msra.mxu0 0.0
    %453 = vmatprep.subr.mxu0 0.0
    %454 = vmatpush1.msra.mxu0 0.0
    %455 = vmatprep.subr.mxu0 0.0
    %456 = vmatpush1.msra.mxu0 0.0
    %457 = vmatprep.subr.mxu0 0.0
    %458 = vmatpush1.msra.mxu0 0.0
    %459 = vmatprep.subr.mxu0 0.0
    %460 = vmatpush1.msra.mxu0 0.0
    %461 = vmatprep.subr.mxu0 0.0
    %462 = vmatpush1.msra.mxu0 0.0
    %463 = vmatprep.subr.mxu0 0.0
    %464 = vmatpush1.msra.mxu0 0.0
    %465 = vmatprep.subr.mxu0 0.0
    %466 = vmatpush1.msra.mxu0 0.0
    %467 = vmatprep.subr.mxu0 0.0
    %468 = vmatpush1.msra.mxu0 0.0
    %469 = vmatprep.subr.mxu0 0.0
    %470 = vmatpush1.msra.mxu0 0.0
    %471 = vmatprep.subr.mxu0 0.0
    %472 = vmatpush1.msra.mxu0 0.0
    %473 = vmatprep.subr.mxu0 0.0
    %474 = vmatpush1.msra.mxu0 0.0
    %475 = vmatprep.subr.mxu0 0.0
    %476 = vmatpush1.msra.mxu0 0.0
    %477 = vmatprep.subr.mxu0 0.0
    %478 = vmatpush1.msra.mxu0 0.0
    %479 = vmatprep.subr.mxu0 0.0
    %480 = vmatpush1.msra.mxu0 0.0
    %481 = vmatprep.subr.mxu0 0.0
    %482 = vmatpush1.msra.mxu0 0.0
    %483 = vmatprep.subr.mxu0 0.0
    %484 = vmatpush1.msra.mxu0 0.0
    %485 = vmatprep.subr.mxu0 0.0
    %486 = vmatpush1.msra.mxu0 0.0
    %487 = vmatprep.subr.mxu0 0.0
    %488 = vmatpush1.msra.mxu0 0.0
    %489 = vmatprep.subr.mxu0 0.0
    %490 = vmatpush1.msra.mxu0 0.0
    %491 = vmatprep.subr.mxu0 0.0
    %492 = vmatpush1.msra.mxu0 0.0
    %493 = vmatprep.subr.mxu0 0.0
    %494 = vmatpush1.msra.mxu0 0.0
    %495 = vmatprep.subr.mxu0 0.0
    %496 = vmatpush1.msra.mxu0 0.0
    %497 = vmatprep.mubr.f32.mxu0 0.0
    %498 = vmatmul.mubr.f32.gmra.mrb[0].mxu0 %v429
    %v499 = vpop.f32.mrb[0].mxu0
    %v500 = vadd.f32 0.0, %v499
    %v501 = vpop.f32.mrb[0].mxu0
    %502 = vmatprep.mubr.f32.mxu0 0.0
    %503 = vmatmul.mubr.f32.gmra.mrb[0].mxu0 %v431
    %v504 = vpop.f32.mrb[0].mxu0
    %v505 = vadd.f32 0.0, %v504
    %v506 = vpop.f32.mrb[0].mxu0
    %507 = vdwg.mxu0
    %508 = vrot.lane.b32.xlu0 %v148, 112
    %v509 = vpop.permute.xlu0 %508
    %510 = vrot.lane.b32.xlu0 %v153, 112
    %v511 = vpop.permute.xlu0 %510
    %v512 = vsel %vm343, %v509, 0
    %v514 = vsel %vm343, %v511, 0
    %516 = vmatprep.subr.mxu0 0.0
    %517 = vmatpush1.msra.mxu0 %v313
    %518 = vmatprep.subr.mxu0 0.0
    %519 = vmatpush1.msra.mxu0 0.0
    %520 = vmatprep.subr.mxu0 0.0
    %521 = vmatpush1.msra.mxu0 0.0
    %522 = vmatprep.subr.mxu0 0.0
    %523 = vmatpush1.msra.mxu0 0.0
    %524 = vmatprep.subr.mxu0 0.0
    %525 = vmatpush1.msra.mxu0 0.0
    %526 = vmatprep.subr.mxu0 0.0
    %527 = vmatpush1.msra.mxu0 0.0
    %528 = vmatprep.subr.mxu0 0.0
    %529 = vmatpush1.msra.mxu0 0.0
    %530 = vmatprep.subr.mxu0 0.0
    %531 = vmatpush1.msra.mxu0 0.0
    %532 = vmatprep.subr.mxu0 0.0
    %533 = vmatpush1.msra.mxu0 0.0
    %534 = vmatprep.subr.mxu0 0.0
    %535 = vmatpush1.msra.mxu0 0.0
    %536 = vmatprep.subr.mxu0 0.0
    %537 = vmatpush1.msra.mxu0 0.0
    %538 = vmatprep.subr.mxu0 0.0
    %539 = vmatpush1.msra.mxu0 0.0
    %540 = vmatprep.subr.mxu0 0.0
    %541 = vmatpush1.msra.mxu0 0.0
    %542 = vmatprep.subr.mxu0 0.0
    %543 = vmatpush1.msra.mxu0 0.0
    %544 = vmatprep.subr.mxu0 0.0
    %545 = vmatpush1.msra.mxu0 0.0
    %546 = vmatprep.subr.mxu0 0.0
    %547 = vmatpush1.msra.mxu0 0.0
    %548 = vmatprep.subr.mxu0 0.0
    %549 = vmatpush1.msra.mxu0 0.0
    %550 = vmatprep.subr.mxu0 0.0
    %551 = vmatpush1.msra.mxu0 0.0
    %552 = vmatprep.subr.mxu0 0.0
    %553 = vmatpush1.msra.mxu0 0.0
    %554 = vmatprep.subr.mxu0 0.0
    %555 = vmatpush1.msra.mxu0 0.0
    %556 = vmatprep.subr.mxu0 0.0
    %557 = vmatpush1.msra.mxu0 0.0
    %558 = vmatprep.subr.mxu0 0.0
    %559 = vmatpush1.msra.mxu0 0.0
    %560 = vmatprep.subr.mxu0 0.0
    %561 = vmatpush1.msra.mxu0 0.0
    %562 = vmatprep.subr.mxu0 0.0
    %563 = vmatpush1.msra.mxu0 0.0
    %564 = vmatprep.subr.mxu0 0.0
    %565 = vmatpush1.msra.mxu0 0.0
    %566 = vmatprep.subr.mxu0 0.0
    %567 = vmatpush1.msra.mxu0 0.0
    %568 = vmatprep.subr.mxu0 0.0
    %569 = vmatpush1.msra.mxu0 0.0
    %570 = vmatprep.subr.mxu0 0.0
    %571 = vmatpush1.msra.mxu0 0.0
    %572 = vmatprep.subr.mxu0 0.0
    %573 = vmatpush1.msra.mxu0 0.0
    %574 = vmatprep.subr.mxu0 0.0
    %575 = vmatpush1.msra.mxu0 0.0
    %576 = vmatprep.subr.mxu0 0.0
    %577 = vmatpush1.msra.mxu0 0.0
    %578 = vmatprep.subr.mxu0 0.0
    %579 = vmatpush1.msra.mxu0 0.0
    %580 = vmatprep.mubr.f32.mxu0 0.0
    %581 = vmatmul.mubr.f32.gmra.mrb[0].mxu0 %v512
    %v582 = vpop.f32.mrb[0].mxu0
    %v583 = vadd.f32 0.0, %v582
    %v584 = vpop.f32.mrb[0].mxu0
    %585 = vmatprep.mubr.f32.mxu0 0.0
    %586 = vmatmul.mubr.f32.gmra.mrb[0].mxu0 %v514
    %v587 = vpop.f32.mrb[0].mxu0
    %v588 = vadd.f32 0.0, %v587
    %v589 = vpop.f32.mrb[0].mxu0
    %590 = vdwg.mxu0
    %591 = vrot.lane.b32.xlu0 %v148, 104
    %v592 = vpop.permute.xlu0 %591
    %593 = vrot.lane.b32.xlu0 %v153, 104
    %v594 = vpop.permute.xlu0 %593
    %v595 = vsel %vm343, %v592, 0
    %v597 = vsel %vm343, %v594, 0
    %599 = vmatprep.subr.mxu0 0.0
    %600 = vmatpush1.msra.mxu0 %v318
    %601 = vmatprep.subr.mxu0 0.0
    %602 = vmatpush1.msra.mxu0 0.0
    %603 = vmatprep.subr.mxu0 0.0
    %604 = vmatpush1.msra.mxu0 0.0
    %605 = vmatprep.subr.mxu0 0.0
    %606 = vmatpush1.msra.mxu0 0.0
    %607 = vmatprep.subr.mxu0 0.0
    %608 = vmatpush1.msra.mxu0 0.0
    %609 = vmatprep.subr.mxu0 0.0
    %610 = vmatpush1.msra.mxu0 0.0
    %611 = vmatprep.subr.mxu0 0.0
    %612 = vmatpush1.msra.mxu0 0.0
    %613 = vmatprep.subr.mxu0 0.0
    %614 = vmatpush1.msra.mxu0 0.0
    %615 = vmatprep.subr.mxu0 0.0
    %616 = vmatpush1.msra.mxu0 0.0
    %617 = vmatprep.subr.mxu0 0.0
    %618 = vmatpush1.msra.mxu0 0.0
    %619 = vmatprep.subr.mxu0 0.0
    %620 = vmatpush1.msra.mxu0 0.0
    %621 = vmatprep.subr.mxu0 0.0
    %622 = vmatpush1.msra.mxu0 0.0
    %623 = vmatprep.subr.mxu0 0.0
    %624 = vmatpush1.msra.mxu0 0.0
    %625 = vmatprep.subr.mxu0 0.0
    %626 = vmatpush1.msra.mxu0 0.0
    %627 = vmatprep.subr.mxu0 0.0
    %628 = vmatpush1.msra.mxu0 0.0
    %629 = vmatprep.subr.mxu0 0.0
    %630 = vmatpush1.msra.mxu0 0.0
    %631 = vmatprep.subr.mxu0 0.0
    %632 = vmatpush1.msra.mxu0 0.0
    %633 = vmatprep.subr.mxu0 0.0
    %634 = vmatpush1.msra.mxu0 0.0
    %635 = vmatprep.subr.mxu0 0.0
    %636 = vmatpush1.msra.mxu0 0.0
    %637 = vmatprep.subr.mxu0 0.0
    %638 = vmatpush1.msra.mxu0 0.0
    %639 = vmatprep.subr.mxu0 0.0
    %640 = vmatpush1.msra.mxu0 0.0
    %641 = vmatprep.subr.mxu0 0.0
    %642 = vmatpush1.msra.mxu0 0.0
    %643 = vmatprep.subr.mxu0 0.0
    %644 = vmatpush1.msra.mxu0 0.0
    %645 = vmatprep.subr.mxu0 0.0
    %646 = vmatpush1.msra.mxu0 0.0
    %647 = vmatprep.subr.mxu0 0.0
    %648 = vmatpush1.msra.mxu0 0.0
    %649 = vmatprep.subr.mxu0 0.0
    %650 = vmatpush1.msra.mxu0 0.0
    %651 = vmatprep.subr.mxu0 0.0
    %652 = vmatpush1.msra.mxu0 0.0
    %653 = vmatprep.subr.mxu0 0.0
    %654 = vmatpush1.msra.mxu0 0.0
    %655 = vmatprep.subr.mxu0 0.0
    %656 = vmatpush1.msra.mxu0 0.0
    %657 = vmatprep.subr.mxu0 0.0
    %658 = vmatpush1.msra.mxu0 0.0
    %659 = vmatprep.subr.mxu0 0.0
    %660 = vmatpush1.msra.mxu0 0.0
    %661 = vmatprep.subr.mxu0 0.0
    %662 = vmatpush1.msra.mxu0 0.0
    %663 = vmatprep.mubr.f32.mxu0 0.0
    %664 = vmatmul.mubr.f32.gmra.mrb[0].mxu0 %v595
    %v665 = vpop.f32.mrb[0].mxu0
    %v666 = vadd.f32 0.0, %v665
    %v667 = vpop.f32.mrb[0].mxu0
    %668 = vmatprep.mubr.f32.mxu0 0.0
    %669 = vmatmul.mubr.f32.gmra.mrb[0].mxu0 %v597
    %v670 = vpop.f32.mrb[0].mxu0
    %v671 = vadd.f32 0.0, %v670
    %v672 = vpop.f32.mrb[0].mxu0
    %673 = vdwg.mxu0
    %v674 = vadd.f32 %v417, %v341
    %v675 = vadd.f32 %v422, %v342
    %v676 = vadd.f32 %v500, %v341
    %v677 = vadd.f32 %v505, %v342
    %v678 = vadd.f32 %v583, %v341
    %v679 = vadd.f32 %v588, %v342
    %v680 = vadd.f32 %v666, %v341
    %v681 = vadd.f32 %v671, %v342
    %vm682 = vcmask 130048
    %v683 = vsel %vm682, %v674, -inf
    %684 = vmax.xlane.f32.xlu0 %v683
    %v685 = vpop.xlane.xlu0 %684
    %v686 = vsel %vm682, %v675, -inf
    %687 = vmax.xlane.f32.xlu0 %v686
    %v688 = vpop.xlane.xlu0 %687
    %v689 = vsel %vm682, %v676, -inf
    %690 = vmax.xlane.f32.xlu0 %v689
    %v691 = vpop.xlane.xlu0 %690
    %v692 = vsel %vm682, %v677, -inf
    %693 = vmax.xlane.f32.xlu0 %v692
    %v694 = vpop.xlane.xlu0 %693
    %v695 = vsel %vm682, %v678, -inf
    %696 = vmax.xlane.f32.xlu0 %v695
    %v697 = vpop.xlane.xlu0 %696
    %v698 = vsel %vm682, %v679, -inf
    %699 = vmax.xlane.f32.xlu0 %v698
    %v700 = vpop.xlane.xlu0 %699
    %v701 = vsel %vm682, %v680, -inf
    %702 = vmax.xlane.f32.xlu0 %v701
    %v703 = vpop.xlane.xlu0 %702
    %v704 = vsel %vm682, %v681, -inf
    %705 = vmax.xlane.f32.xlu0 %v704
    %v706 = vpop.xlane.xlu0 %705
    %v707 = vsub.f32 %v674, %v685
    %v708 = vsub.f32 %v675, %v688
    %v709 = vsub.f32 %v676, %v691
    %v710 = vsub.f32 %v677, %v694
    %v711 = vsub.f32 %v678, %v697
    %v712 = vsub.f32 %v679, %v700
    %v713 = vsub.f32 %v680, %v703
    %v714 = vsub.f32 %v681, %v706
    %v715 = vmul.f32 %v707, 1.442695
    %v716 = vpow.pop %v715
    %v717 = vmul.f32 %v708, 1.442695
    %v718 = vpow.pop %v717
    %v719 = vmul.f32 %v709, 1.442695
    %v720 = vpow.pop %v719
    %v721 = vmul.f32 %v710, 1.442695
    %v722 = vpow.pop %v721
    %v723 = vmul.f32 %v711, 1.442695
    %v724 = vpow.pop %v723
    %v725 = vmul.f32 %v712, 1.442695
    %v726 = vpow.pop %v725
    %v727 = vmul.f32 %v713, 1.442695
    %v728 = vpow.pop %v727
    %v729 = vmul.f32 %v714, 1.442695
    %v730 = vpow.pop %v729
    %v731 = vsel %vm682, %v716, 0.0
    %732 = vadd.xlane.f32.xlu0 %v731
    %v733 = vpop.xlane.xlu0 %732
    %v734 = vsel %vm682, %v718, 0.0
    %735 = vadd.xlane.f32.xlu0 %v734
    %v736 = vpop.xlane.xlu0 %735
    %v737 = vsel %vm682, %v720, 0.0
    %738 = vadd.xlane.f32.xlu0 %v737
    %v739 = vpop.xlane.xlu0 %738
    %v740 = vsel %vm682, %v722, 0.0
    %741 = vadd.xlane.f32.xlu0 %v740
    %v742 = vpop.xlane.xlu0 %741
    %v743 = vsel %vm682, %v724, 0.0
    %744 = vadd.xlane.f32.xlu0 %v743
    %v745 = vpop.xlane.xlu0 %744
    %v746 = vsel %vm682, %v726, 0.0
    %747 = vadd.xlane.f32.xlu0 %v746
    %v748 = vpop.xlane.xlu0 %747
    %v749 = vsel %vm682, %v728, 0.0
    %750 = vadd.xlane.f32.xlu0 %v749
    %v751 = vpop.xlane.xlu0 %750
    %v752 = vsel %vm682, %v730, 0.0
    %753 = vadd.xlane.f32.xlu0 %v752
    %v754 = vpop.xlane.xlu0 %753
    %v755 = vrcp.pop %v733
    %v756 = vmul.f32 %v716, %v755
    %v757 = vrcp.pop %v736
    %v758 = vmul.f32 %v718, %v757
    %v759 = vrcp.pop %v739
    %v760 = vmul.f32 %v720, %v759
    %v761 = vrcp.pop %v742
    %v762 = vmul.f32 %v722, %v761
    %v763 = vrcp.pop %v745
    %v764 = vmul.f32 %v724, %v763
    %v765 = vrcp.pop %v748
    %v766 = vmul.f32 %v726, %v765
    %v767 = vrcp.pop %v751
    %v768 = vmul.f32 %v728, %v767
    %v769 = vrcp.pop %v754
    %v770 = vmul.f32 %v730, %v769
    %v771 = vld [vmem:[%s8] sm:$0x1]
    %v773 = vsel %vm682, %v756, 0
    %v776 = vsel %vm682, %v758, 0
    %v779 = vsel %vm682, %v323, 0
    %781 = vmatprep.subr.mxu0 0.0
    %782 = vmatpush1.xpose.msra.mxu0 %v779
    %783 = vmatprep.subr.mxu0 0.0
    %784 = vmatpush1.xpose.msra.mxu0 0.0
    %785 = vmatprep.subr.mxu0 0.0
    %786 = vmatpush1.xpose.msra.mxu0 0.0
    %787 = vmatprep.subr.mxu0 0.0
    %788 = vmatpush1.xpose.msra.mxu0 0.0
    %789 = vmatprep.subr.mxu0 0.0
    %790 = vmatpush1.xpose.msra.mxu0 0.0
    %791 = vmatprep.subr.mxu0 0.0
    %792 = vmatpush1.xpose.msra.mxu0 0.0
    %793 = vmatprep.subr.mxu0 0.0
    %794 = vmatpush1.xpose.msra.mxu0 0.0
    %795 = vmatprep.subr.mxu0 0.0
    %796 = vmatpush1.xpose.msra.mxu0 0.0
    %797 = vmatprep.subr.mxu0 0.0
    %798 = vmatpush1.xpose.msra.mxu0 0.0
    %799 = vmatprep.subr.mxu0 0.0
    %800 = vmatpush1.xpose.msra.mxu0 0.0
    %801 = vmatprep.subr.mxu0 0.0
    %802 = vmatpush1.xpose.msra.mxu0 0.0
    %803 = vmatprep.subr.mxu0 0.0
    %804 = vmatpush1.xpose.msra.mxu0 0.0
    %805 = vmatprep.subr.mxu0 0.0
    %806 = vmatpush1.xpose.msra.mxu0 0.0
    %807 = vmatprep.subr.mxu0 0.0
    %808 = vmatpush1.xpose.msra.mxu0 0.0
    %809 = vmatprep.subr.mxu0 0.0
    %810 = vmatpush1.xpose.msra.mxu0 0.0
    %811 = vmatprep.subr.mxu0 0.0
    %812 = vmatpush1.xpose.msra.mxu0 0.0
    %813 = vmatprep.subr.mxu0 0.0
    %814 = vmatpush1.xpose.msra.mxu0 0.0
    %815 = vmatprep.subr.mxu0 0.0
    %816 = vmatpush1.xpose.msra.mxu0 0.0
    %817 = vmatprep.subr.mxu0 0.0
    %818 = vmatpush1.xpose.msra.mxu0 0.0
    %819 = vmatprep.subr.mxu0 0.0
    %820 = vmatpush1.xpose.msra.mxu0 0.0
    %821 = vmatprep.subr.mxu0 0.0
    %822 = vmatpush1.xpose.msra.mxu0 0.0
    %823 = vmatprep.subr.mxu0 0.0
    %824 = vmatpush1.xpose.msra.mxu0 0.0
    %825 = vmatprep.subr.mxu0 0.0
    %826 = vmatpush1.xpose.msra.mxu0 0.0
    %827 = vmatprep.subr.mxu0 0.0
    %828 = vmatpush1.xpose.msra.mxu0 0.0
    %829 = vmatprep.subr.mxu0 0.0
    %830 = vmatpush1.xpose.msra.mxu0 0.0
    %831 = vmatprep.subr.mxu0 0.0
    %832 = vmatpush1.xpose.msra.mxu0 0.0
    %833 = vmatprep.subr.mxu0 0.0
    %834 = vmatpush1.xpose.msra.mxu0 0.0
    %835 = vmatprep.subr.mxu0 0.0
    %836 = vmatpush1.xpose.msra.mxu0 0.0
    %837 = vmatprep.subr.mxu0 0.0
    %838 = vmatpush1.xpose.msra.mxu0 0.0
    %839 = vmatprep.subr.mxu0 0.0
    %840 = vmatpush1.xpose.msra.mxu0 0.0
    %841 = vmatprep.subr.mxu0 0.0
    %842 = vmatpush1.xpose.msra.mxu0 0.0
    %843 = vmatprep.subr.mxu0 0.0
    %844 = vmatpush1.xpose.msra.mxu0 0.0
    %845 = vmatprep.mubr.f32.mxu0 0.0
    %846 = vmatmul.mubr.f32.gmra.mrb[0].mxu0 %v773
    %v847 = vpop.f32.mrb[0].mxu0
    %v848 = vadd.f32 0.0, %v847
    %v849 = vpop.f32.mrb[0].mxu0
    %850 = vmatprep.mubr.f32.mxu0 0.0
    %851 = vmatmul.mubr.f32.gmra.mrb[0].mxu0 %v776
    %v852 = vpop.f32.mrb[0].mxu0
    %v853 = vadd.f32 0.0, %v852
    %v854 = vpop.f32.mrb[0].mxu0
    %855 = vdwg.mxu0
    %v856 = vld [vmem:[%s7] sm:$0xff]
    %v858 = vsel %vm343, %v848, 0
    %v861 = vsel %vm343, %v853, 0
    %863 = vmatprep.subr.mxu0 0.0
    %864 = vmatpush1.msra.mxu0 %v856
    %865 = vmatprep.subr.mxu0 0.0
    %866 = vmatpush1.msra.mxu0 0.0
    %867 = vmatprep.subr.mxu0 0.0
    %868 = vmatpush1.msra.mxu0 0.0
    %869 = vmatprep.subr.mxu0 0.0
    %870 = vmatpush1.msra.mxu0 0.0
    %871 = vmatprep.subr.mxu0 0.0
    %872 = vmatpush1.msra.mxu0 0.0
    %873 = vmatprep.subr.mxu0 0.0
    %874 = vmatpush1.msra.mxu0 0.0
    %875 = vmatprep.subr.mxu0 0.0
    %876 = vmatpush1.msra.mxu0 0.0
    %877 = vmatprep.subr.mxu0 0.0
    %878 = vmatpush1.msra.mxu0 0.0
    %879 = vmatprep.subr.mxu0 0.0
    %880 = vmatpush1.msra.mxu0 0.0
    %881 = vmatprep.subr.mxu0 0.0
    %882 = vmatpush1.msra.mxu0 0.0
    %883 = vmatprep.subr.mxu0 0.0
    %884 = vmatpush1.msra.mxu0 0.0
    %885 = vmatprep.subr.mxu0 0.0
    %886 = vmatpush1.msra.mxu0 0.0
    %887 = vmatprep.subr.mxu0 0.0
    %888 = vmatpush1.msra.mxu0 0.0
    %889 = vmatprep.subr.mxu0 0.0
    %890 = vmatpush1.msra.mxu0 0.0
    %891 = vmatprep.subr.mxu0 0.0
    %892 = vmatpush1.msra.mxu0 0.0
    %893 = vmatprep.subr.mxu0 0.0
    %894 = vmatpush1.msra.mxu0 0.0
    %895 = vmatprep.subr.mxu0 0.0
    %896 = vmatpush1.msra.mxu0 0.0
    %897 = vmatprep.subr.mxu0 0.0
    %898 = vmatpush1.msra.mxu0 0.0
    %899 = vmatprep.subr.mxu0 0.0
    %900 = vmatpush1.msra.mxu0 0.0
    %901 = vmatprep.subr.mxu0 0.0
    %902 = vmatpush1.msra.mxu0 0.0
    %903 = vmatprep.subr.mxu0 0.0
    %904 = vmatpush1.msra.mxu0 0.0
    %905 = vmatprep.subr.mxu0 0.0
    %906 = vmatpush1.msra.mxu0 0.0
    %907 = vmatprep.subr.mxu0 0.0
    %908 = vmatpush1.msra.mxu0 0.0
    %909 = vmatprep.subr.mxu0 0.0
    %910 = vmatpush1.msra.mxu0 0.0
    %911 = vmatprep.subr.mxu0 0.0
    %912 = vmatpush1.msra.mxu0 0.0
    %913 = vmatprep.subr.mxu0 0.0
    %914 = vmatpush1.msra.mxu0 0.0
    %915 = vmatprep.subr.mxu0 0.0
    %916 = vmatpush1.msra.mxu0 0.0
    %917 = vmatprep.subr.mxu0 0.0
    %918 = vmatpush1.msra.mxu0 0.0
    %919 = vmatprep.subr.mxu0 0.0
    %920 = vmatpush1.msra.mxu0 0.0
    %921 = vmatprep.subr.mxu0 0.0
    %922 = vmatpush1.msra.mxu0 0.0
    %923 = vmatprep.subr.mxu0 0.0
    %924 = vmatpush1.msra.mxu0 0.0
    %925 = vmatprep.subr.mxu0 0.0
    %926 = vmatpush1.msra.mxu0 0.0
    %927 = vmatprep.mubr.f32.mxu0 0.0
    %928 = vmatmul.mubr.f32.gmra.mrb[0].mxu0 %v858
    %v929 = vpop.f32.mrb[0].mxu0
    %v930 = vadd.f32 0.0, %v929
    %v931 = vpop.f32.mrb[0].mxu0
    %932 = vmatprep.mubr.f32.mxu0 0.0
    %933 = vmatmul.mubr.f32.gmra.mrb[0].mxu0 %v861
    %v934 = vpop.f32.mrb[0].mxu0
    %v935 = vadd.f32 0.0, %v934
    %v936 = vpop.f32.mrb[0].mxu0
    %937 = vdwg.mxu0
    %v939 = vlaneseq
    %v940 = vshrl.u32 %v939, 7
    %v941 = vsub.s32 0, %v940
    %v942 = vrot.slane %v771, %v941
    %v944 = vadd.f32 %v942, %v930
    %v945 = vadd.f32 %v942, %v935
    %v947 = vsel %vm682, %v760, 0
    %v950 = vsel %vm682, %v762, 0
    %v953 = vsel %vm682, %v328, 0
    %955 = vmatprep.subr.mxu0 0.0
    %956 = vmatpush1.xpose.msra.mxu0 %v953
    %957 = vmatprep.subr.mxu0 0.0
    %958 = vmatpush1.xpose.msra.mxu0 0.0
    %959 = vmatprep.subr.mxu0 0.0
    %960 = vmatpush1.xpose.msra.mxu0 0.0
    %961 = vmatprep.subr.mxu0 0.0
    %962 = vmatpush1.xpose.msra.mxu0 0.0
    %963 = vmatprep.subr.mxu0 0.0
    %964 = vmatpush1.xpose.msra.mxu0 0.0
    %965 = vmatprep.subr.mxu0 0.0
    %966 = vmatpush1.xpose.msra.mxu0 0.0
    %967 = vmatprep.subr.mxu0 0.0
    %968 = vmatpush1.xpose.msra.mxu0 0.0
    %969 = vmatprep.subr.mxu0 0.0
    %970 = vmatpush1.xpose.msra.mxu0 0.0
    %971 = vmatprep.subr.mxu0 0.0
    %972 = vmatpush1.xpose.msra.mxu0 0.0
    %973 = vmatprep.subr.mxu0 0.0
    %974 = vmatpush1.xpose.msra.mxu0 0.0
    %975 = vmatprep.subr.mxu0 0.0
    %976 = vmatpush1.xpose.msra.mxu0 0.0
    %977 = vmatprep.subr.mxu0 0.0
    %978 = vmatpush1.xpose.msra.mxu0 0.0
    %979 = vmatprep.subr.mxu0 0.0
    %980 = vmatpush1.xpose.msra.mxu0 0.0
    %981 = vmatprep.subr.mxu0 0.0
    %982 = vmatpush1.xpose.msra.mxu0 0.0
    %983 = vmatprep.subr.mxu0 0.0
    %984 = vmatpush1.xpose.msra.mxu0 0.0
    %985 = vmatprep.subr.mxu0 0.0
    %986 = vmatpush1.xpose.msra.mxu0 0.0
    %987 = vmatprep.subr.mxu0 0.0
    %988 = vmatpush1.xpose.msra.mxu0 0.0
    %989 = vmatprep.subr.mxu0 0.0
    %990 = vmatpush1.xpose.msra.mxu0 0.0
    %991 = vmatprep.subr.mxu0 0.0
    %992 = vmatpush1.xpose.msra.mxu0 0.0
    %993 = vmatprep.subr.mxu0 0.0
    %994 = vmatpush1.xpose.msra.mxu0 0.0
    %995 = vmatprep.subr.mxu0 0.0
    %996 = vmatpush1.xpose.msra.mxu0 0.0
    %997 = vmatprep.subr.mxu0 0.0
    %998 = vmatpush1.xpose.msra.mxu0 0.0
    %999 = vmatprep.subr.mxu0 0.0
    %1000 = vmatpush1.xpose.msra.mxu0 0.0
    %1001 = vmatprep.subr.mxu0 0.0
    %1002 = vmatpush1.xpose.msra.mxu0 0.0
    %1003 = vmatprep.subr.mxu0 0.0
    %1004 = vmatpush1.xpose.msra.mxu0 0.0
    %1005 = vmatprep.subr.mxu0 0.0
    %1006 = vmatpush1.xpose.msra.mxu0 0.0
    %1007 = vmatprep.subr.mxu0 0.0
    %1008 = vmatpush1.xpose.msra.mxu0 0.0
    %1009 = vmatprep.subr.mxu0 0.0
    %1010 = vmatpush1.xpose.msra.mxu0 0.0
    %1011 = vmatprep.subr.mxu0 0.0
    %1012 = vmatpush1.xpose.msra.mxu0 0.0
    %1013 = vmatprep.subr.mxu0 0.0
    %1014 = vmatpush1.xpose.msra.mxu0 0.0
    %1015 = vmatprep.subr.mxu0 0.0
    %1016 = vmatpush1.xpose.msra.mxu0 0.0
    %1017 = vmatprep.subr.mxu0 0.0
    %1018 = vmatpush1.xpose.msra.mxu0 0.0
    %1019 = vmatprep.mubr.f32.mxu0 0.0
    %1020 = vmatmul.mubr.f32.gmra.mrb[0].mxu0 %v947
    %v1021 = vpop.f32.mrb[0].mxu0
    %v1022 = vadd.f32 0.0, %v1021
    %v1023 = vpop.f32.mrb[0].mxu0
    %1024 = vmatprep.mubr.f32.mxu0 0.0
    %1025 = vmatmul.mubr.f32.gmra.mrb[0].mxu0 %v950
    %v1026 = vpop.f32.mrb[0].mxu0
    %v1027 = vadd.f32 0.0, %v1026
    %v1028 = vpop.f32.mrb[0].mxu0
    %1029 = vdwg.mxu0
    %s1030 = scalar_lea.vmem %s7, 8
    %v1031 = vld [vmem:[%s1030] sm:$0xff]
    %v1033 = vsel %vm343, %v1022, 0
    %v1036 = vsel %vm343, %v1027, 0
    %1038 = vmatprep.subr.mxu0 0.0
    %1039 = vmatpush1.msra.mxu0 %v1031
    %1040 = vmatprep.subr.mxu0 0.0
    %1041 = vmatpush1.msra.mxu0 0.0
    %1042 = vmatprep.subr.mxu0 0.0
    %1043 = vmatpush1.msra.mxu0 0.0
    %1044 = vmatprep.subr.mxu0 0.0
    %1045 = vmatpush1.msra.mxu0 0.0
    %1046 = vmatprep.subr.mxu0 0.0
    %1047 = vmatpush1.msra.mxu0 0.0
    %1048 = vmatprep.subr.mxu0 0.0
    %1049 = vmatpush1.msra.mxu0 0.0
    %1050 = vmatprep.subr.mxu0 0.0
    %1051 = vmatpush1.msra.mxu0 0.0
    %1052 = vmatprep.subr.mxu0 0.0
    %1053 = vmatpush1.msra.mxu0 0.0
    %1054 = vmatprep.subr.mxu0 0.0
    %1055 = vmatpush1.msra.mxu0 0.0
    %1056 = vmatprep.subr.mxu0 0.0
    %1057 = vmatpush1.msra.mxu0 0.0
    %1058 = vmatprep.subr.mxu0 0.0
    %1059 = vmatpush1.msra.mxu0 0.0
    %1060 = vmatprep.subr.mxu0 0.0
    %1061 = vmatpush1.msra.mxu0 0.0
    %1062 = vmatprep.subr.mxu0 0.0
    %1063 = vmatpush1.msra.mxu0 0.0
    %1064 = vmatprep.subr.mxu0 0.0
    %1065 = vmatpush1.msra.mxu0 0.0
    %1066 = vmatprep.subr.mxu0 0.0
    %1067 = vmatpush1.msra.mxu0 0.0
    %1068 = vmatprep.subr.mxu0 0.0
    %1069 = vmatpush1.msra.mxu0 0.0
    %1070 = vmatprep.subr.mxu0 0.0
    %1071 = vmatpush1.msra.mxu0 0.0
    %1072 = vmatprep.subr.mxu0 0.0
    %1073 = vmatpush1.msra.mxu0 0.0
    %1074 = vmatprep.subr.mxu0 0.0
    %1075 = vmatpush1.msra.mxu0 0.0
    %1076 = vmatprep.subr.mxu0 0.0
    %1077 = vmatpush1.msra.mxu0 0.0
    %1078 = vmatprep.subr.mxu0 0.0
    %1079 = vmatpush1.msra.mxu0 0.0
    %1080 = vmatprep.subr.mxu0 0.0
    %1081 = vmatpush1.msra.mxu0 0.0
    %1082 = vmatprep.subr.mxu0 0.0
    %1083 = vmatpush1.msra.mxu0 0.0
    %1084 = vmatprep.subr.mxu0 0.0
    %1085 = vmatpush1.msra.mxu0 0.0
    %1086 = vmatprep.subr.mxu0 0.0
    %1087 = vmatpush1.msra.mxu0 0.0
    %1088 = vmatprep.subr.mxu0 0.0
    %1089 = vmatpush1.msra.mxu0 0.0
    %1090 = vmatprep.subr.mxu0 0.0
    %1091 = vmatpush1.msra.mxu0 0.0
    %1092 = vmatprep.subr.mxu0 0.0
    %1093 = vmatpush1.msra.mxu0 0.0
    %1094 = vmatprep.subr.mxu0 0.0
    %1095 = vmatpush1.msra.mxu0 0.0
    %1096 = vmatprep.subr.mxu0 0.0
    %1097 = vmatpush1.msra.mxu0 0.0
    %1098 = vmatprep.subr.mxu0 0.0
    %1099 = vmatpush1.msra.mxu0 0.0
    %1100 = vmatprep.subr.mxu0 0.0
    %1101 = vmatpush1.msra.mxu0 0.0
    %1102 = vmatprep.mubr.f32.mxu0 0.0
    %1103 = vmatmul.mubr.f32.gmra.mrb[0].mxu0 %v1033
    %v1104 = vpop.f32.mrb[0].mxu0
    %v1105 = vadd.f32 0.0, %v1104
    %v1106 = vpop.f32.mrb[0].mxu0
    %1107 = vmatprep.mubr.f32.mxu0 0.0
    %1108 = vmatmul.mubr.f32.gmra.mrb[0].mxu0 %v1036
    %v1109 = vpop.f32.mrb[0].mxu0
    %v1110 = vadd.f32 0.0, %v1109
    %v1111 = vpop.f32.mrb[0].mxu0
    %1112 = vdwg.mxu0
    %v1113 = vadd.f32 %v944, %v1105
    %v1114 = vadd.f32 %v945, %v1110
    %v1116 = vsel %vm682, %v764, 0
    %v1119 = vsel %vm682, %v766, 0
    %v1122 = vsel %vm682, %v333, 0
    %1124 = vmatprep.subr.mxu0 0.0
    %1125 = vmatpush1.xpose.msra.mxu0 %v1122
    %1126 = vmatprep.subr.mxu0 0.0
    %1127 = vmatpush1.xpose.msra.mxu0 0.0
    %1128 = vmatprep.subr.mxu0 0.0
    %1129 = vmatpush1.xpose.msra.mxu0 0.0
    %1130 = vmatprep.subr.mxu0 0.0
    %1131 = vmatpush1.xpose.msra.mxu0 0.0
    %1132 = vmatprep.subr.mxu0 0.0
    %1133 = vmatpush1.xpose.msra.mxu0 0.0
    %1134 = vmatprep.subr.mxu0 0.0
    %1135 = vmatpush1.xpose.msra.mxu0 0.0
    %1136 = vmatprep.subr.mxu0 0.0
    %1137 = vmatpush1.xpose.msra.mxu0 0.0
    %1138 = vmatprep.subr.mxu0 0.0
    %1139 = vmatpush1.xpose.msra.mxu0 0.0
    %1140 = vmatprep.subr.mxu0 0.0
    %1141 = vmatpush1.xpose.msra.mxu0 0.0
    %1142 = vmatprep.subr.mxu0 0.0
    %1143 = vmatpush1.xpose.msra.mxu0 0.0
    %1144 = vmatprep.subr.mxu0 0.0
    %1145 = vmatpush1.xpose.msra.mxu0 0.0
    %1146 = vmatprep.subr.mxu0 0.0
    %1147 = vmatpush1.xpose.msra.mxu0 0.0
    %1148 = vmatprep.subr.mxu0 0.0
    %1149 = vmatpush1.xpose.msra.mxu0 0.0
    %1150 = vmatprep.subr.mxu0 0.0
    %1151 = vmatpush1.xpose.msra.mxu0 0.0
    %1152 = vmatprep.subr.mxu0 0.0
    %1153 = vmatpush1.xpose.msra.mxu0 0.0
    %1154 = vmatprep.subr.mxu0 0.0
    %1155 = vmatpush1.xpose.msra.mxu0 0.0
    %1156 = vmatprep.subr.mxu0 0.0
    %1157 = vmatpush1.xpose.msra.mxu0 0.0
    %1158 = vmatprep.subr.mxu0 0.0
    %1159 = vmatpush1.xpose.msra.mxu0 0.0
    %1160 = vmatprep.subr.mxu0 0.0
    %1161 = vmatpush1.xpose.msra.mxu0 0.0
    %1162 = vmatprep.subr.mxu0 0.0
    %1163 = vmatpush1.xpose.msra.mxu0 0.0
    %1164 = vmatprep.subr.mxu0 0.0
    %1165 = vmatpush1.xpose.msra.mxu0 0.0
    %1166 = vmatprep.subr.mxu0 0.0
    %1167 = vmatpush1.xpose.msra.mxu0 0.0
    %1168 = vmatprep.subr.mxu0 0.0
    %1169 = vmatpush1.xpose.msra.mxu0 0.0
    %1170 = vmatprep.subr.mxu0 0.0
    %1171 = vmatpush1.xpose.msra.mxu0 0.0
    %1172 = vmatprep.subr.mxu0 0.0
    %1173 = vmatpush1.xpose.msra.mxu0 0.0
    %1174 = vmatprep.subr.mxu0 0.0
    %1175 = vmatpush1.xpose.msra.mxu0 0.0
    %1176 = vmatprep.subr.mxu0 0.0
    %1177 = vmatpush1.xpose.msra.mxu0 0.0
    %1178 = vmatprep.subr.mxu0 0.0
    %1179 = vmatpush1.xpose.msra.mxu0 0.0
    %1180 = vmatprep.subr.mxu0 0.0
    %1181 = vmatpush1.xpose.msra.mxu0 0.0
    %1182 = vmatprep.subr.mxu0 0.0
    %1183 = vmatpush1.xpose.msra.mxu0 0.0
    %1184 = vmatprep.subr.mxu0 0.0
    %1185 = vmatpush1.xpose.msra.mxu0 0.0
    %1186 = vmatprep.subr.mxu0 0.0
    %1187 = vmatpush1.xpose.msra.mxu0 0.0
    %1188 = vmatprep.mubr.f32.mxu0 0.0
    %1189 = vmatmul.mubr.f32.gmra.mrb[0].mxu0 %v1116
    %v1190 = vpop.f32.mrb[0].mxu0
    %v1191 = vadd.f32 0.0, %v1190
    %v1192 = vpop.f32.mrb[0].mxu0
    %1193 = vmatprep.mubr.f32.mxu0 0.0
    %1194 = vmatmul.mubr.f32.gmra.mrb[0].mxu0 %v1119
    %v1195 = vpop.f32.mrb[0].mxu0
    %v1196 = vadd.f32 0.0, %v1195
    %v1197 = vpop.f32.mrb[0].mxu0
    %1198 = vdwg.mxu0
    %s1199 = scalar_lea.vmem %s7, 16
    %v1200 = vld [vmem:[%s1199] sm:$0xff]
    %v1202 = vsel %vm343, %v1191, 0
    %v1205 = vsel %vm343, %v1196, 0
    %1207 = vmatprep.subr.mxu0 0.0
    %1208 = vmatpush1.msra.mxu0 %v1200
    %1209 = vmatprep.subr.mxu0 0.0
    %1210 = vmatpush1.msra.mxu0 0.0
    %1211 = vmatprep.subr.mxu0 0.0
    %1212 = vmatpush1.msra.mxu0 0.0
    %1213 = vmatprep.subr.mxu0 0.0
    %1214 = vmatpush1.msra.mxu0 0.0
    %1215 = vmatprep.subr.mxu0 0.0
    %1216 = vmatpush1.msra.mxu0 0.0
    %1217 = vmatprep.subr.mxu0 0.0
    %1218 = vmatpush1.msra.mxu0 0.0
    %1219 = vmatprep.subr.mxu0 0.0
    %1220 = vmatpush1.msra.mxu0 0.0
    %1221 = vmatprep.subr.mxu0 0.0
    %1222 = vmatpush1.msra.mxu0 0.0
    %1223 = vmatprep.subr.mxu0 0.0
    %1224 = vmatpush1.msra.mxu0 0.0
    %1225 = vmatprep.subr.mxu0 0.0
    %1226 = vmatpush1.msra.mxu0 0.0
    %1227 = vmatprep.subr.mxu0 0.0
    %1228 = vmatpush1.msra.mxu0 0.0
    %1229 = vmatprep.subr.mxu0 0.0
    %1230 = vmatpush1.msra.mxu0 0.0
    %1231 = vmatprep.subr.mxu0 0.0
    %1232 = vmatpush1.msra.mxu0 0.0
    %1233 = vmatprep.subr.mxu0 0.0
    %1234 = vmatpush1.msra.mxu0 0.0
    %1235 = vmatprep.subr.mxu0 0.0
    %1236 = vmatpush1.msra.mxu0 0.0
    %1237 = vmatprep.subr.mxu0 0.0
    %1238 = vmatpush1.msra.mxu0 0.0
    %1239 = vmatprep.subr.mxu0 0.0
    %1240 = vmatpush1.msra.mxu0 0.0
    %1241 = vmatprep.subr.mxu0 0.0
    %1242 = vmatpush1.msra.mxu0 0.0
    %1243 = vmatprep.subr.mxu0 0.0
    %1244 = vmatpush1.msra.mxu0 0.0
    %1245 = vmatprep.subr.mxu0 0.0
    %1246 = vmatpush1.msra.mxu0 0.0
    %1247 = vmatprep.subr.mxu0 0.0
    %1248 = vmatpush1.msra.mxu0 0.0
    %1249 = vmatprep.subr.mxu0 0.0
    %1250 = vmatpush1.msra.mxu0 0.0
    %1251 = vmatprep.subr.mxu0 0.0
    %1252 = vmatpush1.msra.mxu0 0.0
    %1253 = vmatprep.subr.mxu0 0.0
    %1254 = vmatpush1.msra.mxu0 0.0
    %1255 = vmatprep.subr.mxu0 0.0
    %1256 = vmatpush1.msra.mxu0 0.0
    %1257 = vmatprep.subr.mxu0 0.0
    %1258 = vmatpush1.msra.mxu0 0.0
    %1259 = vmatprep.subr.mxu0 0.0
    %1260 = vmatpush1.msra.mxu0 0.0
    %1261 = vmatprep.subr.mxu0 0.0
    %1262 = vmatpush1.msra.mxu0 0.0
    %1263 = vmatprep.subr.mxu0 0.0
    %1264 = vmatpush1.msra.mxu0 0.0
    %1265 = vmatprep.subr.mxu0 0.0
    %1266 = vmatpush1.msra.mxu0 0.0
    %1267 = vmatprep.subr.mxu0 0.0
    %1268 = vmatpush1.msra.mxu0 0.0
    %1269 = vmatprep.subr.mxu0 0.0
    %1270 = vmatpush1.msra.mxu0 0.0
    %1271 = vmatprep.mubr.f32.mxu0 0.0
    %1272 = vmatmul.mubr.f32.gmra.mrb[0].mxu0 %v1202
    %v1273 = vpop.f32.mrb[0].mxu0
    %v1274 = vadd.f32 0.0, %v1273
    %v1275 = vpop.f32.mrb[0].mxu0
    %1276 = vmatprep.mubr.f32.mxu0 0.0
    %1277 = vmatmul.mubr.f32.gmra.mrb[0].mxu0 %v1205
    %v1278 = vpop.f32.mrb[0].mxu0
    %v1279 = vadd.f32 0.0, %v1278
    %v1280 = vpop.f32.mrb[0].mxu0
    %1281 = vdwg.mxu0
    %v1282 = vadd.f32 %v1113, %v1274
    %v1283 = vadd.f32 %v1114, %v1279
    %v1285 = vsel %vm682, %v768, 0
    %v1288 = vsel %vm682, %v770, 0
    %v1291 = vsel %vm682, %v338, 0
    %1293 = vmatprep.subr.mxu0 0.0
    %1294 = vmatpush1.xpose.msra.mxu0 %v1291
    %1295 = vmatprep.subr.mxu0 0.0
    %1296 = vmatpush1.xpose.msra.mxu0 0.0
    %1297 = vmatprep.subr.mxu0 0.0
    %1298 = vmatpush1.xpose.msra.mxu0 0.0
    %1299 = vmatprep.subr.mxu0 0.0
    %1300 = vmatpush1.xpose.msra.mxu0 0.0
    %1301 = vmatprep.subr.mxu0 0.0
    %1302 = vmatpush1.xpose.msra.mxu0 0.0
    %1303 = vmatprep.subr.mxu0 0.0
    %1304 = vmatpush1.xpose.msra.mxu0 0.0
    %1305 = vmatprep.subr.mxu0 0.0
    %1306 = vmatpush1.xpose.msra.mxu0 0.0
    %1307 = vmatprep.subr.mxu0 0.0
    %1308 = vmatpush1.xpose.msra.mxu0 0.0
    %1309 = vmatprep.subr.mxu0 0.0
    %1310 = vmatpush1.xpose.msra.mxu0 0.0
    %1311 = vmatprep.subr.mxu0 0.0
    %1312 = vmatpush1.xpose.msra.mxu0 0.0
    %1313 = vmatprep.subr.mxu0 0.0
    %1314 = vmatpush1.xpose.msra.mxu0 0.0
    %1315 = vmatprep.subr.mxu0 0.0
    %1316 = vmatpush1.xpose.msra.mxu0 0.0
    %1317 = vmatprep.subr.mxu0 0.0
    %1318 = vmatpush1.xpose.msra.mxu0 0.0
    %1319 = vmatprep.subr.mxu0 0.0
    %1320 = vmatpush1.xpose.msra.mxu0 0.0
    %1321 = vmatprep.subr.mxu0 0.0
    %1322 = vmatpush1.xpose.msra.mxu0 0.0
    %1323 = vmatprep.subr.mxu0 0.0
    %1324 = vmatpush1.xpose.msra.mxu0 0.0
    %1325 = vmatprep.subr.mxu0 0.0
    %1326 = vmatpush1.xpose.msra.mxu0 0.0
    %1327 = vmatprep.subr.mxu0 0.0
    %1328 = vmatpush1.xpose.msra.mxu0 0.0
    %1329 = vmatprep.subr.mxu0 0.0
    %1330 = vmatpush1.xpose.msra.mxu0 0.0
    %1331 = vmatprep.subr.mxu0 0.0
    %1332 = vmatpush1.xpose.msra.mxu0 0.0
    %1333 = vmatprep.subr.mxu0 0.0
    %1334 = vmatpush1.xpose.msra.mxu0 0.0
    %1335 = vmatprep.subr.mxu0 0.0
    %1336 = vmatpush1.xpose.msra.mxu0 0.0
    %1337 = vmatprep.subr.mxu0 0.0
    %1338 = vmatpush1.xpose.msra.mxu0 0.0
    %1339 = vmatprep.subr.mxu0 0.0
    %1340 = vmatpush1.xpose.msra.mxu0 0.0
    %1341 = vmatprep.subr.mxu0 0.0
    %1342 = vmatpush1.xpose.msra.mxu0 0.0
    %1343 = vmatprep.subr.mxu0 0.0
    %1344 = vmatpush1.xpose.msra.mxu0 0.0
    %1345 = vmatprep.subr.mxu0 0.0
    %1346 = vmatpush1.xpose.msra.mxu0 0.0
    %1347 = vmatprep.subr.mxu0 0.0
    %1348 = vmatpush1.xpose.msra.mxu0 0.0
    %1349 = vmatprep.subr.mxu0 0.0
    %1350 = vmatpush1.xpose.msra.mxu0 0.0
    %1351 = vmatprep.subr.mxu0 0.0
    %1352 = vmatpush1.xpose.msra.mxu0 0.0
    %1353 = vmatprep.subr.mxu0 0.0
    %1354 = vmatpush1.xpose.msra.mxu0 0.0
    %1355 = vmatprep.subr.mxu0 0.0
    %1356 = vmatpush1.xpose.msra.mxu0 0.0
    %1357 = vmatprep.mubr.f32.mxu0 0.0
    %1358 = vmatmul.mubr.f32.gmra.mrb[0].mxu0 %v1285
    %v1359 = vpop.f32.mrb[0].mxu0
    %v1360 = vadd.f32 0.0, %v1359
    %v1361 = vpop.f32.mrb[0].mxu0
    %1362 = vmatprep.mubr.f32.mxu0 0.0
    %1363 = vmatmul.mubr.f32.gmra.mrb[0].mxu0 %v1288
    %v1364 = vpop.f32.mrb[0].mxu0
    %v1365 = vadd.f32 0.0, %v1364
    %v1366 = vpop.f32.mrb[0].mxu0
    %1367 = vdwg.mxu0
    %s1368 = scalar_lea.vmem %s7, 24
    %v1369 = vld [vmem:[%s1368] sm:$0xff]
    %v1371 = vsel %vm343, %v1360, 0
    %v1374 = vsel %vm343, %v1365, 0
    %1376 = vmatprep.subr.mxu0 0.0
    %1377 = vmatpush1.msra.mxu0 %v1369
    %1378 = vmatprep.subr.mxu0 0.0
    %1379 = vmatpush1.msra.mxu0 0.0
    %1380 = vmatprep.subr.mxu0 0.0
    %1381 = vmatpush1.msra.mxu0 0.0
    %1382 = vmatprep.subr.mxu0 0.0
    %1383 = vmatpush1.msra.mxu0 0.0
    %1384 = vmatprep.subr.mxu0 0.0
    %1385 = vmatpush1.msra.mxu0 0.0
    %1386 = vmatprep.subr.mxu0 0.0
    %1387 = vmatpush1.msra.mxu0 0.0
    %1388 = vmatprep.subr.mxu0 0.0
    %1389 = vmatpush1.msra.mxu0 0.0
    %1390 = vmatprep.subr.mxu0 0.0
    %1391 = vmatpush1.msra.mxu0 0.0
    %1392 = vmatprep.subr.mxu0 0.0
    %1393 = vmatpush1.msra.mxu0 0.0
    %1394 = vmatprep.subr.mxu0 0.0
    %1395 = vmatpush1.msra.mxu0 0.0
    %1396 = vmatprep.subr.mxu0 0.0
    %1397 = vmatpush1.msra.mxu0 0.0
    %1398 = vmatprep.subr.mxu0 0.0
    %1399 = vmatpush1.msra.mxu0 0.0
    %1400 = vmatprep.subr.mxu0 0.0
    %1401 = vmatpush1.msra.mxu0 0.0
    %1402 = vmatprep.subr.mxu0 0.0
    %1403 = vmatpush1.msra.mxu0 0.0
    %1404 = vmatprep.subr.mxu0 0.0
    %1405 = vmatpush1.msra.mxu0 0.0
    %1406 = vmatprep.subr.mxu0 0.0
    %1407 = vmatpush1.msra.mxu0 0.0
    %1408 = vmatprep.subr.mxu0 0.0
    %1409 = vmatpush1.msra.mxu0 0.0
    %1410 = vmatprep.subr.mxu0 0.0
    %1411 = vmatpush1.msra.mxu0 0.0
    %1412 = vmatprep.subr.mxu0 0.0
    %1413 = vmatpush1.msra.mxu0 0.0
    %1414 = vmatprep.subr.mxu0 0.0
    %1415 = vmatpush1.msra.mxu0 0.0
    %1416 = vmatprep.subr.mxu0 0.0
    %1417 = vmatpush1.msra.mxu0 0.0
    %1418 = vmatprep.subr.mxu0 0.0
    %1419 = vmatpush1.msra.mxu0 0.0
    %1420 = vmatprep.subr.mxu0 0.0
    %1421 = vmatpush1.msra.mxu0 0.0
    %1422 = vmatprep.subr.mxu0 0.0
    %1423 = vmatpush1.msra.mxu0 0.0
    %1424 = vmatprep.subr.mxu0 0.0
    %1425 = vmatpush1.msra.mxu0 0.0
    %1426 = vmatprep.subr.mxu0 0.0
    %1427 = vmatpush1.msra.mxu0 0.0
    %1428 = vmatprep.subr.mxu0 0.0
    %1429 = vmatpush1.msra.mxu0 0.0
    %1430 = vmatprep.subr.mxu0 0.0
    %1431 = vmatpush1.msra.mxu0 0.0
    %1432 = vmatprep.subr.mxu0 0.0
    %1433 = vmatpush1.msra.mxu0 0.0
    %1434 = vmatprep.subr.mxu0 0.0
    %1435 = vmatpush1.msra.mxu0 0.0
    %1436 = vmatprep.subr.mxu0 0.0
    %1437 = vmatpush1.msra.mxu0 0.0
    %1438 = vmatprep.subr.mxu0 0.0
    %1439 = vmatpush1.msra.mxu0 0.0
    %1440 = vmatprep.mubr.f32.mxu0 0.0
    %1441 = vmatmul.mubr.f32.gmra.mrb[0].mxu0 %v1371
    %v1442 = vpop.f32.mrb[0].mxu0
    %v1443 = vadd.f32 0.0, %v1442
    %v1444 = vpop.f32.mrb[0].mxu0
    %1445 = vmatprep.mubr.f32.mxu0 0.0
    %1446 = vmatmul.mubr.f32.gmra.mrb[0].mxu0 %v1374
    %v1447 = vpop.f32.mrb[0].mxu0
    %v1448 = vadd.f32 0.0, %v1447
    %v1449 = vpop.f32.mrb[0].mxu0
    %1450 = vdwg.mxu0
    %v1451 = vadd.f32 %v1282, %v1443
    %v1452 = vadd.f32 %v1283, %v1448
    %v1453 = vadd.f32 %v57, %v1451
    %v1454 = vadd.f32 %v58, %v1452
    %v1455 = vld [vmem:[%s9] sm:$0x1]
    %v1456 = vld [vmem:[%s10] sm:$0x1]
    %v1457 = vsel %vm74, %v1453, 0.0
    %1458 = vadd.xlane.f32.xlu0 %v1457
    %v1459 = vpop.xlane.xlu0 %1458
    %v1460 = vsel %vm74, %v1454, 0.0
    %1461 = vadd.xlane.f32.xlu0 %v1460
    %v1462 = vpop.xlane.xlu0 %1461
    %v1463 = vrcp.pop 32.0
    %v1464 = vmul.f32 %v1459, %v1463
    %v1465 = vmul.f32 %v1462, %v1463
    %v1466 = vsub.f32 %v1453, %v1464
    %v1467 = vsub.f32 %v1454, %v1465
    %v1468 = vmul.f32 %v1466, %v1466
    %v1469 = vmul.f32 %v1467, %v1467
    %v1470 = vsel %vm74, %v1468, 0.0
    %1471 = vadd.xlane.f32.xlu0 %v1470
    %v1472 = vpop.xlane.xlu0 %1471
    %v1473 = vsel %vm74, %v1469, 0.0
    %1474 = vadd.xlane.f32.xlu0 %v1473
    %v1475 = vpop.xlane.xlu0 %1474
    %v1476 = vmul.f32 %v1472, %v1463
    %v1477 = vmul.f32 %v1475, %v1463
    %v1478 = vadd.f32 %v1476, 1e-05
    %v1479 = vadd.f32 %v1477, 1e-05
    %v1480 = vrsqrt.pop %v1478
    %v1481 = vrsqrt.pop %v1479
    %v1482 = vmul.f32 %v1466, %v1480
    %v1483 = vmul.f32 %v1467, %v1481
    %v1485 = vlaneseq
    %v1486 = vshrl.u32 %v1485, 7
    %v1487 = vsub.s32 0, %v1486
    %v1488 = vrot.slane %v1455, %v1487
    %v1490 = vmul.f32 %v1482, %v1488
    %v1491 = vmul.f32 %v1483, %v1488
    %v1493 = vlaneseq
    %v1494 = vshrl.u32 %v1493, 7
    %v1495 = vsub.s32 0, %v1494
    %v1496 = vrot.slane %v1456, %v1495
    %v1498 = vadd.f32 %v1490, %v1496
    %v1499 = vadd.f32 %v1491, %v1496
    %v1500 = vld [vmem:[%s11] sm:$0xff]
    %v1501 = vld [vmem:[%s11 + $0x8] sm:$0xff]
    %v1502 = vld [vmem:[%s11 + $0x10] sm:$0xff]
    %v1503 = vld [vmem:[%s11 + $0x18] sm:$0xff]
    %v1504 = vld [vmem:[%s12] sm:$0x1]
    %v1506 = vlaneseq
    %v1507 = vshrl.u32 %v1506, 7
    %v1508 = vsub.s32 0, %v1507
    %v1509 = vrot.slane %v1504, %v1508
    %v1512 = vsel %vm74, %v1498, 0
    %v1515 = vsel %vm74, %v1499, 0
    %1517 = vmatprep.subr.mxu0 0.0
    %1518 = vmatpush1.msra.mxu0 %v1500
    %1519 = vmatprep.subr.mxu0 0.0
    %1520 = vmatpush1.msra.mxu0 %v1501
    %1521 = vmatprep.subr.mxu0 0.0
    %1522 = vmatpush1.msra.mxu0 %v1502
    %1523 = vmatprep.subr.mxu0 0.0
    %1524 = vmatpush1.msra.mxu0 %v1503
    %1525 = vmatprep.subr.mxu0 0.0
    %1526 = vmatpush1.msra.mxu0 0.0
    %1527 = vmatprep.subr.mxu0 0.0
    %1528 = vmatpush1.msra.mxu0 0.0
    %1529 = vmatprep.subr.mxu0 0.0
    %1530 = vmatpush1.msra.mxu0 0.0
    %1531 = vmatprep.subr.mxu0 0.0
    %1532 = vmatpush1.msra.mxu0 0.0
    %1533 = vmatprep.subr.mxu0 0.0
    %1534 = vmatpush1.msra.mxu0 0.0
    %1535 = vmatprep.subr.mxu0 0.0
    %1536 = vmatpush1.msra.mxu0 0.0
    %1537 = vmatprep.subr.mxu0 0.0
    %1538 = vmatpush1.msra.mxu0 0.0
    %1539 = vmatprep.subr.mxu0 0.0
    %1540 = vmatpush1.msra.mxu0 0.0
    %1541 = vmatprep.subr.mxu0 0.0
    %1542 = vmatpush1.msra.mxu0 0.0
    %1543 = vmatprep.subr.mxu0 0.0
    %1544 = vmatpush1.msra.mxu0 0.0
    %1545 = vmatprep.subr.mxu0 0.0
    %1546 = vmatpush1.msra.mxu0 0.0
    %1547 = vmatprep.subr.mxu0 0.0
    %1548 = vmatpush1.msra.mxu0 0.0
    %1549 = vmatprep.subr.mxu0 0.0
    %1550 = vmatpush1.msra.mxu0 0.0
    %1551 = vmatprep.subr.mxu0 0.0
    %1552 = vmatpush1.msra.mxu0 0.0
    %1553 = vmatprep.subr.mxu0 0.0
    %1554 = vmatpush1.msra.mxu0 0.0
    %1555 = vmatprep.subr.mxu0 0.0
    %1556 = vmatpush1.msra.mxu0 0.0
    %1557 = vmatprep.subr.mxu0 0.0
    %1558 = vmatpush1.msra.mxu0 0.0
    %1559 = vmatprep.subr.mxu0 0.0
    %1560 = vmatpush1.msra.mxu0 0.0
    %1561 = vmatprep.subr.mxu0 0.0
    %1562 = vmatpush1.msra.mxu0 0.0
    %1563 = vmatprep.subr.mxu0 0.0
    %1564 = vmatpush1.msra.mxu0 0.0
    %1565 = vmatprep.subr.mxu0 0.0
    %1566 = vmatpush1.msra.mxu0 0.0
    %1567 = vmatprep.subr.mxu0 0.0
    %1568 = vmatpush1.msra.mxu0 0.0
    %1569 = vmatprep.subr.mxu0 0.0
    %1570 = vmatpush1.msra.mxu0 0.0
    %1571 = vmatprep.subr.mxu0 0.0
    %1572 = vmatpush1.msra.mxu0 0.0
    %1573 = vmatprep.subr.mxu0 0.0
    %1574 = vmatpush1.msra.mxu0 0.0
    %1575 = vmatprep.subr.mxu0 0.0
    %1576 = vmatpush1.msra.mxu0 0.0
    %1577 = vmatprep.subr.mxu0 0.0
    %1578 = vmatpush1.msra.mxu0 0.0
    %1579 = vmatprep.subr.mxu0 0.0
    %1580 = vmatpush1.msra.mxu0 0.0
    %1581 = vmatprep.mubr.f32.mxu0 0.0
    %1582 = vmatmul.mubr.f32.gmra.mrb[0].mxu0 %v1512
    %v1583 = vpop.f32.mrb[0].mxu0
    %v1584 = vadd.f32 %v1509, %v1583
    %v1585 = vpop.f32.mrb[0].mxu0
    %1586 = vmatprep.mubr.f32.mxu0 0.0
    %1587 = vmatmul.mubr.f32.gmra.mrb[0].mxu0 %v1515
    %v1588 = vpop.f32.mrb[0].mxu0
    %v1589 = vadd.f32 %v1509, %v1588
    %v1590 = vpop.f32.mrb[0].mxu0
    %1591 = vdwg.mxu0
    %v1592 = vmul.f32 %v1584, 0.5
    %v1593 = vmul.f32 %v1589, 0.5
    %v1594 = vrcp.pop 1.4142135
    %v1595 = vmul.f32 %v1584, %v1594
    %v1596 = vmul.f32 %v1589, %v1594
    %v1597 = verf.f32.pop %v1595
    %v1598 = verf.f32.pop %v1596
    %v1599 = vadd.f32 %v1597, 1.0
    %v1600 = vadd.f32 %v1598, 1.0
    %v1601 = vmul.f32 %v1592, %v1599
    %v1602 = vmul.f32 %v1593, %v1600
    %v1603 = vld [vmem:[%s13] sm:$0xff]
    %v1604 = vld [vmem:[%s13 + $0x8] sm:$0xff]
    %v1605 = vld [vmem:[%s13 + $0x10] sm:$0xff]
    %v1606 = vld [vmem:[%s13 + $0x18] sm:$0xff]
    %v1607 = vld [vmem:[%s13 + $0x20] sm:$0xff]
    %v1608 = vld [vmem:[%s13 + $0x28] sm:$0xff]
    %v1609 = vld [vmem:[%s13 + $0x30] sm:$0xff]
    %v1610 = vld [vmem:[%s13 + $0x38] sm:$0xff]
    %v1611 = vld [vmem:[%s14] sm:$0x1]
    %v1613 = vlaneseq
    %v1614 = vshrl.u32 %v1613, 7
    %v1615 = vsub.s32 0, %v1614
    %v1616 = vrot.slane %v1611, %v1615
    %vm1618 = vcmask 523264
    %v1620 = vsel %vm1618, %v1601, 0
    %v1623 = vsel %vm1618, %v1602, 0
    %1625 = vmatprep.subr.mxu0 0.0
    %1626 = vmatpush1.msra.mxu0 %v1603
    %1627 = vmatprep.subr.mxu0 0.0
    %1628 = vmatpush1.msra.mxu0 %v1604
    %1629 = vmatprep.subr.mxu0 0.0
    %1630 = vmatpush1.msra.mxu0 %v1605
    %1631 = vmatprep.subr.mxu0 0.0
    %1632 = vmatpush1.msra.mxu0 %v1606
    %1633 = vmatprep.subr.mxu0 0.0
    %1634 = vmatpush1.msra.mxu0 %v1607
    %1635 = vmatprep.subr.mxu0 0.0
    %1636 = vmatpush1.msra.mxu0 %v1608
    %1637 = vmatprep.subr.mxu0 0.0
    %1638 = vmatpush1.msra.mxu0 %v1609
    %1639 = vmatprep.subr.mxu0 0.0
    %1640 = vmatpush1.msra.mxu0 %v1610
    %1641 = vmatprep.subr.mxu0 0.0
    %1642 = vmatpush1.msra.mxu0 0.0
    %1643 = vmatprep.subr.mxu0 0.0
    %1644 = vmatpush1.msra.mxu0 0.0
    %1645 = vmatprep.subr.mxu0 0.0
    %1646 = vmatpush1.msra.mxu0 0.0
    %1647 = vmatprep.subr.mxu0 0.0
    %1648 = vmatpush1.msra.mxu0 0.0
    %1649 = vmatprep.subr.mxu0 0.0
    %1650 = vmatpush1.msra.mxu0 0.0
    %1651 = vmatprep.subr.mxu0 0.0
    %1652 = vmatpush1.msra.mxu0 0.0
    %1653 = vmatprep.subr.mxu0 0.0
    %1654 = vmatpush1.msra.mxu0 0.0
    %1655 = vmatprep.subr.mxu0 0.0
    %1656 = vmatpush1.msra.mxu0 0.0
    %1657 = vmatprep.subr.mxu0 0.0
    %1658 = vmatpush1.msra.mxu0 0.0
    %1659 = vmatprep.subr.mxu0 0.0
    %1660 = vmatpush1.msra.mxu0 0.0
    %1661 = vmatprep.subr.mxu0 0.0
    %1662 = vmatpush1.msra.mxu0 0.0
    %1663 = vmatprep.subr.mxu0 0.0
    %1664 = vmatpush1.msra.mxu0 0.0
    %1665 = vmatprep.subr.mxu0 0.0
    %1666 = vmatpush1.msra.mxu0 0.0
    %1667 = vmatprep.subr.mxu0 0.0
    %1668 = vmatpush1.msra.mxu0 0.0
    %1669 = vmatprep.subr.mxu0 0.0
    %1670 = vmatpush1.msra.mxu0 0.0
    %1671 = vmatprep.subr.mxu0 0.0
    %1672 = vmatpush1.msra.mxu0 0.0
    %1673 = vmatprep.subr.mxu0 0.0
    %1674 = vmatpush1.msra.mxu0 0.0
    %1675 = vmatprep.subr.mxu0 0.0
    %1676 = vmatpush1.msra.mxu0 0.0
    %1677 = vmatprep.subr.mxu0 0.0
    %1678 = vmatpush1.msra.mxu0 0.0
    %1679 = vmatprep.subr.mxu0 0.0
    %1680 = vmatpush1.msra.mxu0 0.0
    %1681 = vmatprep.subr.mxu0 0.0
    %1682 = vmatpush1.msra.mxu0 0.0
    %1683 = vmatprep.subr.mxu0 0.0
    %1684 = vmatpush1.msra.mxu0 0.0
    %1685 = vmatprep.subr.mxu0 0.0
    %1686 = vmatpush1.msra.mxu0 0.0
    %1687 = vmatprep.subr.mxu0 0.0
    %1688 = vmatpush1.msra.mxu0 0.0
    %1689 = vmatprep.mubr.f32.mxu0 0.0
    %1690 = vmatmul.mubr.f32.gmra.mrb[0].mxu0 %v1620
    %v1691 = vpop.f32.mrb[0].mxu0
    %v1692 = vadd.f32 %v1616, %v1691
    %v1693 = vpop.f32.mrb[0].mxu0
    %1694 = vmatprep.mubr.f32.mxu0 0.0
    %1695 = vmatmul.mubr.f32.gmra.mrb[0].mxu0 %v1623
    %v1696 = vpop.f32.mrb[0].mxu0
    %v1697 = vadd.f32 %v1616, %v1696
    %v1698 = vpop.f32.mrb[0].mxu0
    %1699 = vdwg.mxu0
    %v1700 = vadd.f32 %v1498, %v1692
    %v1701 = vadd.f32 %v1499, %v1697
    %v1702 = vld [vmem:[%s15] sm:$0x1]
    %v1703 = vld [vmem:[%s16] sm:$0x1]
    %v1704 = vsel %vm74, %v1700, 0.0
    %1705 = vadd.xlane.f32.xlu0 %v1704
    %v1706 = vpop.xlane.xlu0 %1705
    %v1707 = vsel %vm74, %v1701, 0.0
    %1708 = vadd.xlane.f32.xlu0 %v1707
    %v1709 = vpop.xlane.xlu0 %1708
    %v1710 = vmul.f32 %v1706, %v1463
    %v1711 = vmul.f32 %v1709, %v1463
    %v1712 = vsub.f32 %v1700, %v1710
    %v1713 = vsub.f32 %v1701, %v1711
    %v1714 = vmul.f32 %v1712, %v1712
    %v1715 = vmul.f32 %v1713, %v1713
    %v1716 = vsel %vm74, %v1714, 0.0
    %1717 = vadd.xlane.f32.xlu0 %v1716
    %v1718 = vpop.xlane.xlu0 %1717
    %v1719 = vsel %vm74, %v1715, 0.0
    %1720 = vadd.xlane.f32.xlu0 %v1719
    %v1721 = vpop.xlane.xlu0 %1720
    %v1722 = vmul.f32 %v1718, %v1463
    %v1723 = vmul.f32 %v1721, %v1463
    %v1724 = vadd.f32 %v1722, 1e-05
    %v1725 = vadd.f32 %v1723, 1e-05
    %v1726 = vrsqrt.pop %v1724
    %v1727 = vrsqrt.pop %v1725
    %v1728 = vmul.f32 %v1712, %v1726
    %v1729 = vmul.f32 %v1713, %v1727
    %v1731 = vlaneseq
    %v1732 = vshrl.u32 %v1731, 7
    %v1733 = vsub.s32 0, %v1732
    %v1734 = vrot.slane %v1702, %v1733
    %v1736 = vmul.f32 %v1728, %v1734
    %v1737 = vmul.f32 %v1729, %v1734
    %v1739 = vlaneseq
    %v1740 = vshrl.u32 %v1739, 7
    %v1741 = vsub.s32 0, %v1740
    %v1742 = vrot.slane %v1703, %v1741
    %v1744 = vadd.f32 %v1736, %v1742
    %v1745 = vadd.f32 %v1737, %v1742
    %1746 = vst.msk [vmem:[#allocation2] sm:$0xff] %vm74, %v1744
    %1747 = vst.msk [vmem:[#allocation2 + $0x8] sm:$0xff] %vm74, %v1745
    // Predicated region
    $region70: #{transformer_block.1} parent=1 // pred_check
      _
    $region71: #{transformer_block.1} parent=1 // pred_check_branch
      %1749 = sbr.rel (0) target = $region73
    $region72: #{transformer_block.1} parent=1 // pred_region
      %s1751 = ssub.s32 256, 256
      %1752 = vsyncadd [#allocation3], %s1751
      %s1753 = sshll.u32 [#allocation2], 4
      %s1754 = int_to_ptr.vmem [resolvable:$true] %s1753
      %1759 = dma.vmem_to_hbm [thread:$0]  %s1754, 256, %s17, [#allocation3], 128, 128, 8
    $region73: #{transformer_block.1} parent=1 // pred_fallthru
      _
    // Predicated region
    $region74: #{transformer_block.1} parent=1 // pred_check
      _
    $region75: #{transformer_block.1} parent=1 // pred_check_branch
      %1761 = sbr.rel (0) target = $region77
    $region76: #{transformer_block.1} parent=1 // pred_region
      %1762 = dma.done [#allocation3], 256
    $region77: #{transformer_block.1} parent=1 // pred_fallthru
      _
    %1763 = vsyncpa [#allocation3], 1

</llo_original>
